<compile_context>
chip_gen: v7x
topology: tpu7x:2x2x1
jax: 0.10.0
libtpu: 0.0.40
codegen_flags: <defaults>
</compile_context>

<pallas_src>
import functools

import jax
import jax.numpy as jnp
from jax.experimental import pallas as pl
from jax.experimental.pallas import tpu as pltpu


# ----------------------------- Pallas kernels -----------------------------

def _gate_kernel(x_ref, wg_ref, logits_ref):
    # router_logits = x @ gate_w.T : (tT, H) x (H, E) -> (tT, E), f32 output.
    logits_ref[...] = jnp.dot(
        x_ref[...], wg_ref[...], preferred_element_type=jnp.float32
    ).astype(logits_ref.dtype)


def _expert_mlp_kernel(te_ref, xs_ref, w1_ref, w3_ref, w2_ref, rw_ref,
                       out_ref, acc_ref):
    """Grouped expert MLP over routed (expert-sorted, per-expert padded) rows.

    grid = (row-tile g, F-tile f).  te_ref (SMEM, scalar-prefetched) maps each row
    tile to its expert; the weight BlockSpecs use it in their index_maps so this
    body only sees the weights of the expert the tile is routed to.
    """
    f = pl.program_id(1)
    nF = pl.num_programs(1)

    x = xs_ref[...]                                                    # (tA, H)
    h1 = jnp.dot(x, w1_ref[0], preferred_element_type=jnp.float32)     # (tA, tF)
    h3 = jnp.dot(x, w3_ref[0], preferred_element_type=jnp.float32)     # (tA, tF)
    h = (h1 * jax.nn.sigmoid(h1)) * h3                                 # SiLU(w1 x) * (w3 x)

    # Per-row combine weight (0 for padding rows), applied on the small (tA, tF)
    # tile; scaling commutes with the down-projection.
    h = h * rw_ref[...].astype(jnp.float32)                            # (tA, 1) broadcast

    y = jnp.dot(h.astype(w2_ref.dtype), w2_ref[0],
                preferred_element_type=jnp.float32)                    # (tA, H)

    @pl.when(f == 0)
    def _():
        acc_ref[...] = y                                               # no zero+add

    @pl.when(f > 0)
    def _():
        acc_ref[...] += y

    @pl.when(f == nF - 1)
    def _():
        out_ref[...] = acc_ref[...].astype(out_ref.dtype)


# ------------------------------ tiling helpers ------------------------------

def _round_up(x, m):
    return (x + m - 1) // m * m


def _pick_divisor_tile(dim, target, align):
    """Largest multiple of `align` <= target that divides dim, else the full dim."""
    if dim <= align:
        return dim
    t = (min(target, dim) // align) * align
    while t >= align:
        if dim % t == 0:
            return t
        t -= align
    return dim


def _pick_token_tile(dim, target, align=8):
    """Aligned token tile <= target; keeps >= 2 tiles when possible (v7x megacore)."""
    if dim <= align:
        return dim
    t = min(target, dim)
    if dim >= 2 * align:
        t = min(t, _round_up((dim + 1) // 2, align))
    t = max(align, (t // align) * align)
    d = t
    while d >= align:                      # prefer an exact divisor (no ragged block)
        if dim % d == 0:
            return d
        d -= align
    return t


def _pick_row_tile(num_rows, target, align=8):
    """Aligned routed-row tile <= target; keeps >= 2 tiles when possible."""
    if num_rows <= align:
        return align
    t = min(target, _round_up(num_rows, align))
    if num_rows >= 2 * align:
        t = min(t, _round_up((num_rows + 1) // 2, align))
    return max(align, (t // align) * align)


def _vmem_limit_bytes():
    cap = 64 * 1024 * 1024
    try:
        info = pltpu.get_tpu_info()
        cap = int(getattr(info, "vmem_capacity_bytes", cap))
    except Exception:
        pass
    return max(32 * 1024 * 1024, min(int(cap * 0.8), 110 * 1024 * 1024))


# ------------------------------ JAX wrapper --------------------------------

def mixtral_sparse_moe_block(hidden_states, params, top_k=2,
                             token_tile=512, row_tile=512, f_tile=256):
    """Returns (final_hidden_states (B,S,H), router_logits (B*S, E))."""
    B, S, H = hidden_states.shape
    T = B * S
    dtype = hidden_states.dtype

    gate_t = params["gate_t"]          # (H, E)
    w1t = params["w1t"]                # (E, H, F)
    w3t = params["w3t"]                # (E, H, F)
    w2t = params["w2t"]                # (E, F, H)
    E = gate_t.shape[1]
    F = w1t.shape[2]

    x = hidden_states.reshape(T, H)

    # --- router logits (token-tiled Pallas matmul, f32 output) ---
    tT = _pick_token_tile(T, token_tile)
    nT = (T + tT - 1) // tT
    router_logits = pl.pallas_call(
        _gate_kernel,
        out_shape=jax.ShapeDtypeStruct((T, E), jnp.float32),
        grid=(nT,),
        in_specs=[
            pl.BlockSpec((tT, H), lambda i: (i, 0)),
            pl.BlockSpec((H, E), lambda i: (0, 0)),
        ],
        out_specs=pl.BlockSpec((tT, E), lambda i: (i, 0)),
        compiler_params=pltpu.CompilerParams(dimension_semantics=("parallel",)),
    )(x, gate_t)

    # --- top-k routing + expert grouping (tiny (T,E)/(T*k,) glue, stays in XLA) ---
    probs = jax.nn.softmax(router_logits, axis=-1)                     # f32
    topk_w, topk_idx = jax.lax.top_k(probs, top_k)                     # (T, k)
    topk_w = topk_w / jnp.sum(topk_w, axis=-1, keepdims=True)

    A = T * top_k                                                      # assignments
    flat_expert = topk_idx.reshape(A).astype(jnp.int32)
    flat_token = jnp.repeat(jnp.arange(T, dtype=jnp.int32), top_k)
    flat_w = topk_w.reshape(A)

    order = jnp.argsort(flat_expert)                                   # group by expert
    sorted_expert = flat_expert[order]
    sorted_token = flat_token[order]
    sorted_w = flat_w[order]

    # --- tiling / VMEM budget ---
    tF = _pick_divisor_tile(F, f_tile, 128)
    tA = _pick_row_tile(A, row_tile)
    a_bytes = dtype.itemsize
    w_bytes = w1t.dtype.itemsize
    vmem_limit = _vmem_limit_bytes()

    def _vmem_est(ta, tf):
        return (2 * ta * H * a_bytes                     # routed rows (double-buffered)
                + 2 * (2 * H * tf + tf * H) * w_bytes    # w1, w3, w2 tiles
                + 2 * ta * 4                             # combine weights
                + 2 * ta * H * a_bytes                   # output tile
                + ta * H * 4)                            # f32 accumulator

    while _vmem_est(tA, tF) > int(0.85 * vmem_limit):
        if tF > 128 and F % (tF // 2) == 0 and (tF // 2) % 128 == 0:
            tF //= 2
        elif tA > 8:
            tA = max(8, (tA // 2) // 8 * 8)
        else:
            break

    nF = F // tF
    G = (A + tA - 1) // tA + E      # static upper bound on padded row tiles
    P = G * tA

    # Pad each expert's rows to a multiple of tA so a row tile never spans two
    # experts; padding rows point at token 0 with combine weight 0.
    counts = jnp.bincount(flat_expert, length=E)                       # (E,)
    tiles_per_e = (counts + tA - 1) // tA
    tile_start = jnp.cumsum(tiles_per_e) - tiles_per_e                 # exclusive cumsum
    group_start = jnp.cumsum(counts) - counts
    padded_pos = (tile_start[sorted_expert] * tA
                  + jnp.arange(A, dtype=jnp.int32) - group_start[sorted_expert])

    row_token = jnp.zeros((P,), jnp.int32).at[padded_pos].set(sorted_token)
    row_w = jnp.zeros((P,), jnp.float32).at[padded_pos].set(sorted_w)

    tile_bounds = jnp.cumsum(tiles_per_e)
    tile_expert = jnp.searchsorted(tile_bounds, jnp.arange(G, dtype=jnp.int32),
                                   side="right")
    tile_expert = jnp.minimum(tile_expert, E - 1).astype(jnp.int32)    # inactive tiles

    xs = x[row_token]                                                  # (P, H) gather
    row_w2d = row_w.reshape(P, 1)

    cost = pl.CostEstimate(
        flops=int(6 * P * H * F),
        transcendentals=int(P * F),
        bytes_accessed=int(G * 3 * H * F * w_bytes     # streamed expert weights
                           + P * H * a_bytes           # routed rows (once per tile)
                           + P * H * a_bytes           # output writeback
                           + P * 4),                   # combine weights
    )

    # --- routed expert MLPs (grouped matmul with scalar-prefetched expert ids) ---
    y_pad = pl.pallas_call(
        _expert_mlp_kernel,
        out_shape=jax.ShapeDtypeStruct((P, H), dtype),
        grid_spec=pltpu.PrefetchScalarGridSpec(
            num_scalar_prefetch=1,
            grid=(G, nF),
            in_specs=[
                pl.BlockSpec((tA, H), lambda g, f, te: (g, 0)),            # routed rows
                pl.BlockSpec((1, H, tF), lambda g, f, te: (te[g], 0, f)),  # w1
                pl.BlockSpec((1, H, tF), lambda g, f, te: (te[g], 0, f)),  # w3
                pl.BlockSpec((1, tF, H), lambda g, f, te: (te[g], f, 0)),  # w2
                pl.BlockSpec((tA, 1), lambda g, f, te: (g, 0)),            # combine w
            ],
            out_specs=pl.BlockSpec((tA, H), lambda g, f, te: (g, 0)),
            scratch_shapes=[pltpu.VMEM((tA, H), jnp.float32)],
        ),
        compiler_params=pltpu.CompilerParams(
            dimension_semantics=("parallel", "arbitrary"),
            vmem_limit_bytes=vmem_limit,
        ),
        cost_estimate=cost,
    )(tile_expert, xs, w1t, w3t, w2t, row_w2d)

    # Scatter-add routed expert outputs back to token order (combine weight was
    # already applied in-kernel; padding rows are exact zeros added to token 0).
    out = jnp.zeros((T, H), dtype=dtype).at[row_token].add(y_pad)

    # TODO(synk): router_jitter_noise (training-only multiplicative noise) is not
    # applied; eval-mode semantics are reproduced.
    return out.reshape(B, S, H), router_logits.astype(dtype)


# ------------------------- pure-JAX reference (check) -----------------------

def reference_moe(hidden_states, params, top_k=2):
    B, S, H = hidden_states.shape
    x = hidden_states.reshape(-1, H)
    logits = x @ params["gate_t"]
    probs = jax.nn.softmax(logits.astype(jnp.float32), axis=-1)
    topk_w, topk_idx = jax.lax.top_k(probs, top_k)
    topk_w = topk_w / jnp.sum(topk_w, axis=-1, keepdims=True)
    topk_w = topk_w.astype(x.dtype)
    E = params["gate_t"].shape[1]
    combine = jnp.sum(
        jax.nn.one_hot(topk_idx, E, dtype=x.dtype) * topk_w[..., None], axis=1
    )
    out = jnp.zeros_like(x)
    for e in range(E):
        h1 = x @ params["w1t"][e]
        h3 = x @ params["w3t"][e]
        y = (jax.nn.silu(h1) * h3) @ params["w2t"][e]
        out = out + combine[:, e:e + 1] * y
    return out.reshape(B, S, H), logits


# ---------------------------------- main ------------------------------------

if __name__ == "__main__":
    # Small config that still exercises the routed grid:
    # hidden=128, intermediate=256, 8 experts, top-2, batch=2, seq=64 -> T=128, A=256.
    B, S, H, F, E, TOPK = 2, 64, 128, 256, 8, 2

    key = jax.random.PRNGKey(0)
    k_x, k_g, k1, k2, k3 = jax.random.split(key, 5)

    hidden_states = jax.random.normal(k_x, (B, S, H), dtype=jnp.float32)
    params = {
        "gate_t": jax.random.normal(k_g, (H, E), dtype=jnp.float32) * 0.1,
        "w1t": jax.random.normal(k1, (E, H, F), dtype=jnp.float32) * 0.05,
        "w3t": jax.random.normal(k3, (E, H, F), dtype=jnp.float32) * 0.05,
        "w2t": jax.random.normal(k2, (E, F, H), dtype=jnp.float32) * 0.05,
    }

    # Small tiles so the toy shapes exercise a multi-tile (row, F) grid; production
    # defaults (token_tile=512 / row_tile=512 / f_tile=256) are VMEM-budgeted at
    # trace time for v5e/v6e (128 MiB) and v7x (64 MiB per TC).
    moe_fn = jax.jit(functools.partial(
        mixtral_sparse_moe_block, top_k=TOPK,
        token_tile=64, row_tile=32, f_tile=128))
    out, logits = moe_fn(hidden_states, params)
    jax.block_until_ready((out, logits))

    ref_out, ref_logits = reference_moe(hidden_states, params, top_k=TOPK)
    assert jnp.allclose(out, ref_out, atol=2e-3, rtol=2e-3), "output mismatch"
    assert jnp.allclose(logits, ref_logits, atol=2e-3, rtol=2e-3), "logits mismatch"

    print("KERNEL_OK")
</pallas_src>

<mosaic_0001>
module attributes {stable_mosaic.version = 11 : i64} {
  func.func private @main(%arg0: i32) attributes {dimension_semantics = [#tpu.dimension_semantics<core_parallel>], iteration_bounds = array<i64: 2>, tpu.core_type = #tpu.core_type<sc_scalar_subcore>, window_params = []} {
    return
  }
}

module attributes {stable_mosaic.version = 11 : i64} {
  func.func private @main(%arg0: i32) attributes {dimension_semantics = [#tpu.dimension_semantics<core_parallel>], iteration_bounds = array<i64: 2>, tpu.core_type = #tpu.core_type<sc_scalar_subcore>, window_params = []} {
    return
  }
}

module attributes {stable_mosaic.version = 11 : i64} {
  func.func @_gate_kernel(%arg0: i32, %arg1: memref<64x128xf32, #tpu.memory_space<vmem>>, %arg2: memref<128x8xf32, #tpu.memory_space<vmem>>, %arg3: memref<64x8xf32, #tpu.memory_space<vmem>>) attributes {dimension_semantics = [#tpu.dimension_semantics<parallel>], iteration_bounds = array<i64: 2>, scalar_prefetch = 0 : i64, scratch_operands = 0 : i64, tpu.core_type = #tpu.core_type<tc>, window_params = [{transform_indices = @transform_0, window_bounds = array<i64: 64, 128>}, {pipeline_mode = #tpu.pipeline_mode<synchronous>, transform_indices = @transform_1, window_bounds = array<i64: 128, 8>}, {transform_indices = @transform_2, window_bounds = array<i64: 64, 8>}]} {
    %c0 = arith.constant 0 : index
    %c0_0 = arith.constant 0 : index
    %0 = vector.load %arg1[%c0, %c0_0] : memref<64x128xf32, #tpu.memory_space<vmem>>, vector<64x128xf32>
    %c0_1 = arith.constant 0 : index
    %c0_2 = arith.constant 0 : index
    %1 = vector.load %arg2[%c0_1, %c0_2] : memref<128x8xf32, #tpu.memory_space<vmem>>, vector<128x8xf32>
    %cst = arith.constant dense<0.000000e+00> : vector<64x8xf32>
    %2 = tpu.matmul %0, %1, %cst {dimension_numbers = #tpu.dot_dimension_numbers<[1], [0], [0], [1], [0, 0, 1, 1], [], []>} : vector<64x128xf32>, vector<128x8xf32>, vector<64x8xf32> -> vector<64x8xf32>
    %c0_3 = arith.constant 0 : index
    %c0_4 = arith.constant 0 : index
    %3 = vector.load %arg3[%c0_3, %c0_4] : memref<64x8xf32, #tpu.memory_space<vmem>>, vector<64x8xf32>
    tpu.vector_store %arg3[%c0_3, %c0_4], %2 {strides = array<i32>} : memref<64x8xf32, #tpu.memory_space<vmem>>, vector<64x8xf32>,
    return
  }
  func.func @transform_0(%arg0: i32) -> (i32, i32) {
    %c0_i32 = arith.constant 0 : i32
    %c0_i32_0 = arith.constant 0 : i32
    return %arg0, %c0_i32 : i32, i32
  }
  func.func @transform_1(%arg0: i32) -> (i32, i32) {
    %c0_i32 = arith.constant 0 : i32
    %c0_i32_0 = arith.constant 0 : i32
    %c0_i32_1 = arith.constant 0 : i32
    return %c0_i32, %c0_i32_0 : i32, i32
  }
  func.func @transform_2(%arg0: i32) -> (i32, i32) {
    %c0_i32 = arith.constant 0 : i32
    %c0_i32_0 = arith.constant 0 : i32
    return %arg0, %c0_i32 : i32, i32
  }
}

module attributes {stable_mosaic.version = 11 : i64} {
  func.func @_expert_mlp_kernel(%arg0: i32, %arg1: i32, %arg2: memref<16xi32, #tpu.memory_space<smem>>, %arg3: memref<32x128xf32, #tpu.memory_space<vmem>>, %arg4: memref<1x128x128xf32, #tpu.memory_space<vmem>>, %arg5: memref<1x128x128xf32, #tpu.memory_space<vmem>>, %arg6: memref<1x128x128xf32, #tpu.memory_space<vmem>>, %arg7: memref<32x1xf32, #tpu.memory_space<vmem>>, %arg8: memref<32x128xf32, #tpu.memory_space<vmem>>, %arg9: memref<32x128xf32, #tpu.memory_space<vmem>>) attributes {dimension_semantics = [#tpu.dimension_semantics<parallel>, #tpu.dimension_semantics<arbitrary>], iteration_bounds = array<i64: 16, 2>, scalar_prefetch = 1 : i64, scratch_operands = 1 : i64, tpu.core_type = #tpu.core_type<tc>, window_params = [{transform_indices = @transform_0, window_bounds = array<i64: 32, 128>}, {transform_indices = @transform_1, window_bounds = array<i64: 1, 128, 128>}, {transform_indices = @transform_2, window_bounds = array<i64: 1, 128, 128>}, {transform_indices = @transform_3, window_bounds = array<i64: 1, 128, 128>}, {transform_indices = @transform_4, window_bounds = array<i64: 32, 1>}, {transform_indices = @transform_5, window_bounds = array<i64: 32, 128>}]} {
    %c0 = arith.constant 0 : index
    %c0_0 = arith.constant 0 : index
    %0 = vector.load %arg3[%c0, %c0_0] : memref<32x128xf32, #tpu.memory_space<vmem>>, vector<32x128xf32>
    %c0_1 = arith.constant 0 : index
    %c0_2 = arith.constant 0 : index
    %c0_3 = arith.constant 0 : index
    %1 = vector.load %arg4[%c0_1, %c0_2, %c0_3] : memref<1x128x128xf32, #tpu.memory_space<vmem>>, vector<1x128x128xf32>
    %2 = vector.shape_cast %1 : vector<1x128x128xf32> to vector<128x128xf32>
    %cst = arith.constant dense<0.000000e+00> : vector<32x128xf32>
    %3 = tpu.matmul %0, %2, %cst {dimension_numbers = #tpu.dot_dimension_numbers<[1], [0], [0], [1], [0, 0, 1, 1], [], []>} : vector<32x128xf32>, vector<128x128xf32>, vector<32x128xf32> -> vector<32x128xf32>
    %c0_4 = arith.constant 0 : index
    %c0_5 = arith.constant 0 : index
    %c0_6 = arith.constant 0 : index
    %4 = vector.load %arg5[%c0_4, %c0_5, %c0_6] : memref<1x128x128xf32, #tpu.memory_space<vmem>>, vector<1x128x128xf32>
    %5 = vector.shape_cast %4 : vector<1x128x128xf32> to vector<128x128xf32>
    %cst_7 = arith.constant dense<0.000000e+00> : vector<32x128xf32>
    %6 = tpu.matmul %0, %5, %cst_7 {dimension_numbers = #tpu.dot_dimension_numbers<[1], [0], [0], [1], [0, 0, 1, 1], [], []>} : vector<32x128xf32>, vector<128x128xf32>, vector<32x128xf32> -> vector<32x128xf32>
    %7 = arith.negf %3 : vector<32x128xf32>
    %8 = math.exp %7 : vector<32x128xf32>
    %cst_8 = arith.constant 1.000000e+00 : f32
    %9 = vector.broadcast %cst_8 : f32 to vector<32x128xf32>
    %10 = arith.addf %9, %8 : vector<32x128xf32>
    %11 = arith.divf %9, %10 : vector<32x128xf32>
    %12 = arith.mulf %3, %11 : vector<32x128xf32>
    %13 = arith.mulf %12, %6 : vector<32x128xf32>
    %c0_9 = arith.constant 0 : index
    %c0_10 = arith.constant 0 : index
    %14 = vector.load %arg7[%c0_9, %c0_10] : memref<32x1xf32, #tpu.memory_space<vmem>>, vector<32x1xf32>
    %15 = vector.broadcast %14 : vector<32x1xf32> to vector<32x128xf32>
    %16 = arith.mulf %13, %15 : vector<32x128xf32>
    %c0_11 = arith.constant 0 : index
    %c0_12 = arith.constant 0 : index
    %c0_13 = arith.constant 0 : index
    %17 = vector.load %arg6[%c0_11, %c0_12, %c0_13] : memref<1x128x128xf32, #tpu.memory_space<vmem>>, vector<1x128x128xf32>
    %18 = vector.shape_cast %17 : vector<1x128x128xf32> to vector<128x128xf32>
    %cst_14 = arith.constant dense<0.000000e+00> : vector<32x128xf32>
    %19 = tpu.matmul %16, %18, %cst_14 {dimension_numbers = #tpu.dot_dimension_numbers<[1], [0], [0], [1], [0, 0, 1, 1], [], []>} : vector<32x128xf32>, vector<128x128xf32>, vector<32x128xf32> -> vector<32x128xf32>
    %c0_i32 = arith.constant 0 : i32
    %20 = arith.cmpi eq, %arg1, %c0_i32 : i32
    %21 = arith.extui %20 : i1 to i32
    %c0_i32_15 = arith.constant 0 : i32
    %22 = arith.cmpi ne, %21, %c0_i32_15 : i32
    scf.if %22 {
      %c0_19 = arith.constant 0 : index
      %c0_20 = arith.constant 0 : index
      %29 = vector.load %arg9[%c0_19, %c0_20] : memref<32x128xf32, #tpu.memory_space<vmem>>, vector<32x128xf32>
      tpu.vector_store %arg9[%c0_19, %c0_20], %19 {strides = array<i32>} : memref<32x128xf32, #tpu.memory_space<vmem>>, vector<32x128xf32>,
    } else {
    }
    %c0_i32_16 = arith.constant 0 : i32
    %23 = arith.cmpi sgt, %arg1, %c0_i32_16 : i32
    %24 = arith.extui %23 : i1 to i32
    %c0_i32_17 = arith.constant 0 : i32
    %25 = arith.cmpi ne, %24, %c0_i32_17 : i32
    scf.if %25 {
      %c0_19 = arith.constant 0 : index
      %c0_20 = arith.constant 0 : index
      %29 = vector.load %arg9[%c0_19, %c0_20] : memref<32x128xf32, #tpu.memory_space<vmem>>, vector<32x128xf32>
      %30 = arith.addf %29, %19 : vector<32x128xf32>
      %c0_21 = arith.constant 0 : index
      %c0_22 = arith.constant 0 : index
      %31 = vector.load %arg9[%c0_21, %c0_22] : memref<32x128xf32, #tpu.memory_space<vmem>>, vector<32x128xf32>
      tpu.vector_store %arg9[%c0_21, %c0_22], %30 {strides = array<i32>} : memref<32x128xf32, #tpu.memory_space<vmem>>, vector<32x128xf32>,
    } else {
    }
    %c1_i32 = arith.constant 1 : i32
    %26 = arith.cmpi eq, %arg1, %c1_i32 : i32
    %27 = arith.extui %26 : i1 to i32
    %c0_i32_18 = arith.constant 0 : i32
    %28 = arith.cmpi ne, %27, %c0_i32_18 : i32
    scf.if %28 {
      %c0_19 = arith.constant 0 : index
      %c0_20 = arith.constant 0 : index
      %29 = vector.load %arg9[%c0_19, %c0_20] : memref<32x128xf32, #tpu.memory_space<vmem>>, vector<32x128xf32>
      %c0_21 = arith.constant 0 : index
      %c0_22 = arith.constant 0 : index
      %30 = vector.load %arg8[%c0_21, %c0_22] : memref<32x128xf32, #tpu.memory_space<vmem>>, vector<32x128xf32>
      tpu.vector_store %arg8[%c0_21, %c0_22], %29 {strides = array<i32>} : memref<32x128xf32, #tpu.memory_space<vmem>>, vector<32x128xf32>,
    } else {
    }
    return
  }
  func.func @transform_0(%arg0: i32, %arg1: i32, %arg2: memref<16xi32, #tpu.memory_space<smem>>) -> (i32, i32) {
    %c0_i32 = arith.constant 0 : i32
    %c0_i32_0 = arith.constant 0 : i32
    return %arg0, %c0_i32 : i32, i32
  }
  func.func @transform_1(%arg0: i32, %arg1: i32, %arg2: memref<16xi32, #tpu.memory_space<smem>>) -> (i32, i32, i32) {
    %0 = arith.index_cast %arg0 : i32 to index
    %1 = memref.load %arg2[%0] : memref<16xi32, #tpu.memory_space<smem>>
    %c0_i32 = arith.constant 0 : i32
    %c0_i32_0 = arith.constant 0 : i32
    return %1, %c0_i32, %arg1 : i32, i32, i32
  }
  func.func @transform_2(%arg0: i32, %arg1: i32, %arg2: memref<16xi32, #tpu.memory_space<smem>>) -> (i32, i32, i32) {
    %0 = arith.index_cast %arg0 : i32 to index
    %1 = memref.load %arg2[%0] : memref<16xi32, #tpu.memory_space<smem>>
    %c0_i32 = arith.constant 0 : i32
    %c0_i32_0 = arith.constant 0 : i32
    return %1, %c0_i32, %arg1 : i32, i32, i32
  }
  func.func @transform_3(%arg0: i32, %arg1: i32, %arg2: memref<16xi32, #tpu.memory_space<smem>>) -> (i32, i32, i32) {
    %0 = arith.index_cast %arg0 : i32 to index
    %1 = memref.load %arg2[%0] : memref<16xi32, #tpu.memory_space<smem>>
    %c0_i32 = arith.constant 0 : i32
    %c0_i32_0 = arith.constant 0 : i32
    return %1, %arg1, %c0_i32 : i32, i32, i32
  }
  func.func @transform_4(%arg0: i32, %arg1: i32, %arg2: memref<16xi32, #tpu.memory_space<smem>>) -> (i32, i32) {
    %c0_i32 = arith.constant 0 : i32
    %c0_i32_0 = arith.constant 0 : i32
    return %arg0, %c0_i32 : i32, i32
  }
  func.func @transform_5(%arg0: i32, %arg1: i32, %arg2: memref<16xi32, #tpu.memory_space<smem>>) -> (i32, i32) {
    %c0_i32 = arith.constant 0 : i32
    %c0_i32_0 = arith.constant 0 : i32
    return %arg0, %c0_i32 : i32, i32
  }
}

</mosaic_0001>

<llo_original>
// kernel: custom-call.1
$region0: #{custom-call.1}
  %s0 = inlined_call_operand.vmem [shape: u32[16], index: 0, kind: output, shape index: {}]

// kernel: mixtral_sparse_moe_block.2
$region0: #{mixtral_sparse_moe_block.2}
  #allocation0 [shape = 'u32[]', space=smem, size = 0x4, offset = 0x4, fixed_abs, tag = 'smem constant byte address 0x4 - core index']
  #allocation1 [shape = 'u32[144,128]{1,0:T(1,128)}', space=vmem, size = 0x12000, scoped, tag = 'internal scratch']
  %s0 = inlined_call_operand.vmem [shape: f32[128,128], index: 0, kind: input, shape index: {}]
  %s1 = inlined_call_operand.vmem [shape: f32[128,8], index: 1, kind: input, shape index: {}]
  %s2 = inlined_call_operand.vmem [shape: f32[128,8], index: 2, kind: output, shape index: {}]
  %s3 = sld [smem:[#allocation0]]
  $region41: #{mixtral_sparse_moe_block.2} parent=0
    _
  %s5 = ssub.s32 1, %s3
  %s6 = scalar_select 0, %s5, %s3
  loop: start=0, step=1, limit=4
  $region2: #{mixtral_sparse_moe_block.2} parent=0 // loop_pre_header
    _
  $region3: #{mixtral_sparse_moe_block.2} parent=0 // loop_header
    %s8 = sphi 0, %s12
    %p9 = scmp.ge.s32.totalorder %s8, 4
    %s18 = sphi 0, %s20
    %s21 = sphi 0, %s18
    %s22 = sphi 0, %s21
    %s38 = sphi 0, %s22
    %s42 = sphi 0, %s42
    %s44 = sphi 0, %s42
    %s45 = sphi 0, %s44
    %s59 = sphi 0, %s45
    %s65 = sphi 0, %s67
    %s68 = sphi 0, %s65
    %s69 = sphi 0, %s68
    %s85 = sphi 0, %s69
  $region4: #{mixtral_sparse_moe_block.2} parent=0 // loop_header_branch
    %11 = sbr.rel (%p9) target = $region8
  $region5: #{mixtral_sparse_moe_block.2} parent=0 // loop_body
    %s13 = ssub.s32 %s8, 1
    %s14 = ssub.s32 %s8, 2
    %s15 = sadd.s32 %s8, 1
    %s16 = ssub.s32 %s8, %s15
    %p17 = scmp.eq.s32.totalorder %s16, 0
    %s19 = sadd.s32 %s18, 1
    %s20 = scalar_select %p17, %s18, %s19
    %p23 = pneg %p17
    %p24 = scmp.eq.s32.totalorder %s8, 1
    %p25 = por %p23, %p24
    %p26 = scmp.ne.s32.totalorder %s18, %s21
    %p27 = scmp.eq.s32.totalorder %s8, 0
    %p28 = por %p26, %p27
    %p29 = scmp.ne.s32.totalorder %s18, %s21
    %p30 = scmp.eq.s32.totalorder %s13, 1
    %p31 = por %p29, %p30
    %p32 = scmp.ne.s32.totalorder %s21, %s22
    %p33 = scmp.eq.s32.totalorder %s13, 0
    %p34 = por %p32, %p33
    %p35 = scmp.ne.s32.totalorder %s21, %s22
    %p36 = scmp.eq.s32.totalorder %s14, 1
    %p37 = por %p35, %p36
    %p39 = scmp.ne.s32.totalorder %s22, %s38
    %p40 = scmp.eq.s32.totalorder %s14, 0
    %p41 = por %p39, %p40
    %s43 = sadd.s32 %s42, 1
    %p46 = scmp.eq.s32.totalorder %s8, 1
    %p47 = scmp.ne.s32.totalorder %s42, %s44
    %p48 = scmp.eq.s32.totalorder %s8, 0
    %p49 = por %p47, %p48
    %p50 = scmp.ne.s32.totalorder %s42, %s44
    %p51 = scmp.eq.s32.totalorder %s13, 1
    %p52 = por %p50, %p51
    %p53 = scmp.ne.s32.totalorder %s44, %s45
    %p54 = scmp.eq.s32.totalorder %s13, 0
    %p55 = por %p53, %p54
    %p56 = scmp.ne.s32.totalorder %s44, %s45
    %p57 = scmp.eq.s32.totalorder %s14, 1
    %p58 = por %p56, %p57
    %p60 = scmp.ne.s32.totalorder %s45, %s59
    %p61 = scmp.eq.s32.totalorder %s14, 0
    %p62 = por %p60, %p61
    %s63 = ssub.s32 %s8, %s15
    %p64 = scmp.eq.s32.totalorder %s63, 0
    %s66 = sadd.s32 %s65, 1
    %s67 = scalar_select %p64, %s65, %s66
    %p70 = pneg %p64
    %p71 = scmp.eq.s32.totalorder %s8, 1
    %p72 = por %p70, %p71
    %p73 = scmp.ne.s32.totalorder %s65, %s68
    %p74 = scmp.eq.s32.totalorder %s8, 0
    %p75 = por %p73, %p74
    %p76 = scmp.ne.s32.totalorder %s65, %s68
    %p77 = scmp.eq.s32.totalorder %s13, 1
    %p78 = por %p76, %p77
    %p79 = scmp.ne.s32.totalorder %s68, %s69
    %p80 = scmp.eq.s32.totalorder %s13, 0
    %p81 = por %p79, %p80
    %p82 = scmp.ne.s32.totalorder %s68, %s69
    %p83 = scmp.eq.s32.totalorder %s14, 1
    %p84 = por %p82, %p83
    %p86 = scmp.ne.s32.totalorder %s69, %s85
    %p87 = scmp.eq.s32.totalorder %s14, 0
    %p88 = por %p86, %p87
    %p89 = scmp.le.s32.totalorder 1, %s8
    %p90 = scmp.lt.s32.totalorder %s8, 3
    %p91 = pnand %p89, %p90
    %p92 = pneg %p91
    // Predicated region
    $region9: #{mixtral_sparse_moe_block.2} parent=5 // pred_check
      _
    $region10: #{mixtral_sparse_moe_block.2} parent=5 // pred_check_branch
      %94 = sbr.rel (%p91) target = $region12
    $region11: #{mixtral_sparse_moe_block.2} parent=5 // pred_region
      %s95 = ssub.s32 %s8, 1
      // Predicated region
      $region13: #{mixtral_sparse_moe_block.2} parent=11 // pred_check
        %p96 = pneg %p55
      $region14: #{mixtral_sparse_moe_block.2} parent=11 // pred_check_branch
        %98 = sbr.rel (%p96) target = $region16
      $region15: #{mixtral_sparse_moe_block.2} parent=11 // pred_region
        _
      $region16: #{mixtral_sparse_moe_block.2} parent=11 // pred_fallthru
        _
    $region12: #{mixtral_sparse_moe_block.2} parent=5 // pred_fallthru
      _
    %p99 = scmp.lt.s32.totalorder %s8, 2
    // Predicated region
    $region17: #{mixtral_sparse_moe_block.2} parent=5 // pred_check
      %p100 = pneg %p99
    $region18: #{mixtral_sparse_moe_block.2} parent=5 // pred_check_branch
      %102 = sbr.rel (%p100) target = $region20
    $region19: #{mixtral_sparse_moe_block.2} parent=5 // pred_region
      // Predicated region
      $region21: #{mixtral_sparse_moe_block.2} parent=19 // pred_check
        %p103 = pneg %p28
      $region22: #{mixtral_sparse_moe_block.2} parent=19 // pred_check_branch
        %105 = sbr.rel (%p103) target = $region24
      $region23: #{mixtral_sparse_moe_block.2} parent=19 // pred_region
        %s106 = smul.u32 8, %s8
        %p107 = scmp.lt.s32.totalorder %s106, 15
        %s108 = scalar_select %p107, %s106, 15
        %s109 = smul.addr %s108, 8
        %s110 = scalar_lea.vmem %s0, %s109
        %s111 = smul.u32 8, %s8
      $region24: #{mixtral_sparse_moe_block.2} parent=19 // pred_fallthru
        _
    $region20: #{mixtral_sparse_moe_block.2} parent=5 // pred_fallthru
      _
    %p112 = scmp.le.s32.totalorder 1, %s8
    %p113 = scmp.lt.s32.totalorder %s8, 3
    %p114 = pnand %p112, %p113
    %p115 = pneg %p114
    // Predicated region
    $region25: #{mixtral_sparse_moe_block.2} parent=5 // pred_check
      _
    $region26: #{mixtral_sparse_moe_block.2} parent=5 // pred_check_branch
      %117 = sbr.rel (%p114) target = $region28
    $region27: #{mixtral_sparse_moe_block.2} parent=5 // pred_region
      %s118 = ssub.s32 %s8, 1
      %s119 = smul.u32 8, %s13
      %p120 = scmp.lt.s32.totalorder %s119, 15
      %s121 = scalar_select %p120, %s119, 15
      %s122 = smul.addr %s121, 8
      %s123 = scalar_lea.vmem %s0, %s122
      %p124 = pneg %p34
      %p125 = pneg %p31
      %p126 = pneg %p55
      %p127 = pneg %p52
      %p128 = pneg %p81
      %p129 = pneg %p78
      %s130 = smul.u32 8, %s13
      %p131 = scmp.lt.s32.totalorder %s130, 15
      %s132 = scalar_select %p131, %s130, 15
      %s133 = smul.addr %s132, 8
      %s134 = scalar_lea.vmem %s2, %s133
      %s135 = smul.u32 8, %s13
      %p136 = scmp.lt.s32.totalorder %s135, 15
      %s137 = scalar_select %p136, %s135, 15
      %s138 = smul.addr %s137, 8
      %s139 = scalar_lea.vmem %s0, %s138
      %s140 = smul.u32 8, %s13
      %s141 = smul.u32 8, %s13
      %p142 = scmp.lt.s32.totalorder %s141, 15
      %s143 = scalar_select %p142, %s141, 15
      %s144 = smul.addr %s143, 8
      %s145 = scalar_lea.vmem %s2, %s144
      %s146 = smul.u32 8, %s13
      %v147 = vld [vmem:[%s139] sm:$0xff]
      %v148 = vld [vmem:[%s139 + $0x8] sm:$0xff]
      %v149 = vld [vmem:[%s139 + $0x10] sm:$0xff]
      %v150 = vld [vmem:[%s139 + $0x18] sm:$0xff]
      %v151 = vld [vmem:[%s139 + $0x20] sm:$0xff]
      %v152 = vld [vmem:[%s139 + $0x28] sm:$0xff]
      %v153 = vld [vmem:[%s139 + $0x30] sm:$0xff]
      %v154 = vld [vmem:[%s139 + $0x38] sm:$0xff]
      %v155 = vld [vmem:[%s1] sm:$0xff]
      %v156 = vld [vmem:[%s1 + $0x8] sm:$0xff]
      %v157 = vld [vmem:[%s1 + $0x10] sm:$0xff]
      %v158 = vld [vmem:[%s1 + $0x18] sm:$0xff]
      %v159 = vld [vmem:[%s1 + $0x20] sm:$0xff]
      %v160 = vld [vmem:[%s1 + $0x28] sm:$0xff]
      %v161 = vld [vmem:[%s1 + $0x30] sm:$0xff]
      %v162 = vld [vmem:[%s1 + $0x38] sm:$0xff]
      %v163 = vld [vmem:[%s1 + $0x40] sm:$0xff]
      %v164 = vld [vmem:[%s1 + $0x48] sm:$0xff]
      %v165 = vld [vmem:[%s1 + $0x50] sm:$0xff]
      %v166 = vld [vmem:[%s1 + $0x58] sm:$0xff]
      %v167 = vld [vmem:[%s1 + $0x60] sm:$0xff]
      %v168 = vld [vmem:[%s1 + $0x68] sm:$0xff]
      %v169 = vld [vmem:[%s1 + $0x70] sm:$0xff]
      %v170 = vld [vmem:[%s1 + $0x78] sm:$0xff]
      %171 = vmatprep.subr.mxu0 0.0
      %172 = vmatpush1.msra.mxu0 %v155
      %173 = vmatprep.subr.mxu0 0.0
      %174 = vmatpush1.msra.mxu0 %v156
      %175 = vmatprep.subr.mxu0 0.0
      %176 = vmatpush1.msra.mxu0 %v157
      %177 = vmatprep.subr.mxu0 0.0
      %178 = vmatpush1.msra.mxu0 %v158
      %179 = vmatprep.subr.mxu0 0.0
      %180 = vmatpush1.msra.mxu0 %v159
      %181 = vmatprep.subr.mxu0 0.0
      %182 = vmatpush1.msra.mxu0 %v160
      %183 = vmatprep.subr.mxu0 0.0
      %184 = vmatpush1.msra.mxu0 %v161
      %185 = vmatprep.subr.mxu0 0.0
      %186 = vmatpush1.msra.mxu0 %v162
      %187 = vmatprep.subr.mxu0 0.0
      %188 = vmatpush1.msra.mxu0 %v163
      %189 = vmatprep.subr.mxu0 0.0
      %190 = vmatpush1.msra.mxu0 %v164
      %191 = vmatprep.subr.mxu0 0.0
      %192 = vmatpush1.msra.mxu0 %v165
      %193 = vmatprep.subr.mxu0 0.0
      %194 = vmatpush1.msra.mxu0 %v166
      %195 = vmatprep.subr.mxu0 0.0
      %196 = vmatpush1.msra.mxu0 %v167
      %197 = vmatprep.subr.mxu0 0.0
      %198 = vmatpush1.msra.mxu0 %v168
      %199 = vmatprep.subr.mxu0 0.0
      %200 = vmatpush1.msra.mxu0 %v169
      %201 = vmatprep.subr.mxu0 0.0
      %202 = vmatpush1.msra.mxu0 %v170
      %203 = vmatprep.subr.mxu0 0.0
      %204 = vmatpush1.msra.mxu0 0.0
      %205 = vmatprep.subr.mxu0 0.0
      %206 = vmatpush1.msra.mxu0 0.0
      %207 = vmatprep.subr.mxu0 0.0
      %208 = vmatpush1.msra.mxu0 0.0
      %209 = vmatprep.subr.mxu0 0.0
      %210 = vmatpush1.msra.mxu0 0.0
      %211 = vmatprep.subr.mxu0 0.0
      %212 = vmatpush1.msra.mxu0 0.0
      %213 = vmatprep.subr.mxu0 0.0
      %214 = vmatpush1.msra.mxu0 0.0
      %215 = vmatprep.subr.mxu0 0.0
      %216 = vmatpush1.msra.mxu0 0.0
      %217 = vmatprep.subr.mxu0 0.0
      %218 = vmatpush1.msra.mxu0 0.0
      %219 = vmatprep.subr.mxu0 0.0
      %220 = vmatpush1.msra.mxu0 0.0
      %221 = vmatprep.subr.mxu0 0.0
      %222 = vmatpush1.msra.mxu0 0.0
      %223 = vmatprep.subr.mxu0 0.0
      %224 = vmatpush1.msra.mxu0 0.0
      %225 = vmatprep.subr.mxu0 0.0
      %226 = vmatpush1.msra.mxu0 0.0
      %227 = vmatprep.subr.mxu0 0.0
      %228 = vmatpush1.msra.mxu0 0.0
      %229 = vmatprep.subr.mxu0 0.0
      %230 = vmatpush1.msra.mxu0 0.0
      %231 = vmatprep.subr.mxu0 0.0
      %232 = vmatpush1.msra.mxu0 0.0
      %233 = vmatprep.subr.mxu0 0.0
      %234 = vmatpush1.msra.mxu0 0.0
      %235 = vmatprep.mubr.f32.mxu0 0.0
      %236 = vmatmul.mubr.f32.gmra.mrb[0].mxu0 %v147
      %v237 = vpop.f32.mrb[0].mxu0
      %v238 = vadd.f32 0.0, %v237
      %v239 = vpop.f32.mrb[0].mxu0
      %240 = vmatprep.mubr.f32.mxu0 0.0
      %241 = vmatmul.mubr.f32.gmra.mrb[0].mxu0 %v148
      %v242 = vpop.f32.mrb[0].mxu0
      %v243 = vadd.f32 0.0, %v242
      %v244 = vpop.f32.mrb[0].mxu0
      %245 = vmatprep.mubr.f32.mxu0 0.0
      %246 = vmatmul.mubr.f32.gmra.mrb[0].mxu0 %v149
      %v247 = vpop.f32.mrb[0].mxu0
      %v248 = vadd.f32 0.0, %v247
      %v249 = vpop.f32.mrb[0].mxu0
      %250 = vmatprep.mubr.f32.mxu0 0.0
      %251 = vmatmul.mubr.f32.gmra.mrb[0].mxu0 %v150
      %v252 = vpop.f32.mrb[0].mxu0
      %v253 = vadd.f32 0.0, %v252
      %v254 = vpop.f32.mrb[0].mxu0
      %255 = vmatprep.mubr.f32.mxu0 0.0
      %256 = vmatmul.mubr.f32.gmra.mrb[0].mxu0 %v151
      %v257 = vpop.f32.mrb[0].mxu0
      %v258 = vadd.f32 0.0, %v257
      %v259 = vpop.f32.mrb[0].mxu0
      %260 = vmatprep.mubr.f32.mxu0 0.0
      %261 = vmatmul.mubr.f32.gmra.mrb[0].mxu0 %v152
      %v262 = vpop.f32.mrb[0].mxu0
      %v263 = vadd.f32 0.0, %v262
      %v264 = vpop.f32.mrb[0].mxu0
      %265 = vmatprep.mubr.f32.mxu0 0.0
      %266 = vmatmul.mubr.f32.gmra.mrb[0].mxu0 %v153
      %v267 = vpop.f32.mrb[0].mxu0
      %v268 = vadd.f32 0.0, %v267
      %v269 = vpop.f32.mrb[0].mxu0
      %270 = vmatprep.mubr.f32.mxu0 0.0
      %271 = vmatmul.mubr.f32.gmra.mrb[0].mxu0 %v154
      %v272 = vpop.f32.mrb[0].mxu0
      %v273 = vadd.f32 0.0, %v272
      %v274 = vpop.f32.mrb[0].mxu0
      %275 = vdwg.mxu0
      %vm276 = vcmask 64512
      %277 = vst.msk [vmem:[%s145] sm:$0xff] %vm276, %v238
      %278 = vst.msk [vmem:[%s145 + $0x8] sm:$0xff] %vm276, %v243
      %279 = vst.msk [vmem:[%s145 + $0x10] sm:$0xff] %vm276, %v248
      %280 = vst.msk [vmem:[%s145 + $0x18] sm:$0xff] %vm276, %v253
      %281 = vst.msk [vmem:[%s145 + $0x20] sm:$0xff] %vm276, %v258
      %282 = vst.msk [vmem:[%s145 + $0x28] sm:$0xff] %vm276, %v263
      %283 = vst.msk [vmem:[%s145 + $0x30] sm:$0xff] %vm276, %v268
      %284 = vst.msk [vmem:[%s145 + $0x38] sm:$0xff] %vm276, %v273
      %s285 = smul.u32 8, %s13
      %p286 = scmp.lt.s32.totalorder %s285, 15
      %s287 = scalar_select %p286, %s285, 15
      %s288 = smul.addr %s287, 8
      %s289 = scalar_lea.vmem %s2, %s288
      // Predicated region
      $region29: #{mixtral_sparse_moe_block.2} parent=27 // pred_check
        %p290 = pneg %p78
      $region30: #{mixtral_sparse_moe_block.2} parent=27 // pred_check_branch
        %292 = sbr.rel (%p290) target = $region32
      $region31: #{mixtral_sparse_moe_block.2} parent=27 // pred_region
        %s293 = smul.u32 8, %s13
      $region32: #{mixtral_sparse_moe_block.2} parent=27 // pred_fallthru
        _
    $region28: #{mixtral_sparse_moe_block.2} parent=5 // pred_fallthru
      _
    %p294 = scmp.le.s32.totalorder 2, %s8
    // Predicated region
    $region33: #{mixtral_sparse_moe_block.2} parent=5 // pred_check
      %p295 = pneg %p294
    $region34: #{mixtral_sparse_moe_block.2} parent=5 // pred_check_branch
      %297 = sbr.rel (%p295) target = $region36
    $region35: #{mixtral_sparse_moe_block.2} parent=5 // pred_region
      %s298 = ssub.s32 %s8, 2
      // Predicated region
      $region37: #{mixtral_sparse_moe_block.2} parent=35 // pred_check
        %p299 = pneg %p84
      $region38: #{mixtral_sparse_moe_block.2} parent=35 // pred_check_branch
        %301 = sbr.rel (%p299) target = $region40
      $region39: #{mixtral_sparse_moe_block.2} parent=35 // pred_region
        %s302 = smul.u32 8, %s14
        %p303 = scmp.lt.s32.totalorder %s302, 15
        %s304 = scalar_select %p303, %s302, 15
        %s305 = smul.addr %s304, 8
        %s306 = scalar_lea.vmem %s2, %s305
      $region40: #{mixtral_sparse_moe_block.2} parent=35 // pred_fallthru
        _
    $region36: #{mixtral_sparse_moe_block.2} parent=5 // pred_fallthru
      _
  $region6: #{mixtral_sparse_moe_block.2} parent=0 // loop_footer
    %s12 = sadd.s32 1, %s8
  $region7: #{mixtral_sparse_moe_block.2} parent=0 // loop_footer_branch
    %7 = sbr.rel target = $region3
  $region8: #{mixtral_sparse_moe_block.2} parent=0 // loop_exit
    _

// kernel: mixtral_sparse_moe_block.3
$region0: #{mixtral_sparse_moe_block.3}
  #allocation0 [shape = 'u32[]', space=smem, size = 0x4, offset = 0x4, fixed_abs, tag = 'smem constant byte address 0x4 - core index']
  #allocation1 [shape = 'u32[144,128]{1,0:T(1,128)}', space=vmem, size = 0x12000, scoped, tag = 'internal scratch']
  #allocation2 [shape = 'f32[32,128]{1,0:T(8,128)}', space=vmem, size = 0x4000, scoped, tag = 'scratch operand']
  #allocation3 [shape = 's32[1]{0}', space=sflag, size = 0x4, scoped, tag = 'scoped memory for mixtral_sparse_moe_block.3']
  #allocation4 [shape = 'u8[512]{0}', space=smem, size = 0x200, scoped, tag = 'prefetched SMEM operand 0']
  %s0 = inlined_call_operand.vmem [shape: s32[16], index: 0, kind: input, shape index: {}]
  %s1 = inlined_call_operand.vmem [shape: f32[512,128], index: 1, kind: input, shape index: {}]
  %s2 = inlined_call_operand.vmem [shape: f32[8,128,256], index: 2, kind: input, shape index: {}]
  %s3 = inlined_call_operand.vmem [shape: f32[8,128,256], index: 3, kind: input, shape index: {}]
  %s4 = inlined_call_operand.vmem [shape: f32[8,256,128], index: 4, kind: input, shape index: {}]
  %s5 = inlined_call_operand.vmem [shape: f32[512,1], index: 5, kind: input, shape index: {}]
  %s6 = inlined_call_operand.vmem [shape: f32[512,128], index: 6, kind: output, shape index: {}]
  %s7 = sld [smem:[#allocation0]]
  $region141: #{mixtral_sparse_moe_block.3} parent=0
    _
  %s9 = ssub.s32 1, %s7
  %s10 = scalar_select 0, %s9, %s7
  %s11 = sshll.u32 %s0, 4
  %s12 = int_to_ptr.vmem [resolvable:$true] %s11
  %14 = dma.vmem_to_smem %s12, 16, [#allocation4], [#allocation3]
  %15 = dma.done [#allocation3], 16
  %16 = sfence
  $region1: #{mixtral_sparse_moe_block.3} parent=0
    #allocation5 [shape = 'u8[131072]{0}', space=vmem, size = 0x20000, scoped, tag = 'input window, operand 2']
    #allocation6 [shape = 'u8[131072]{0}', space=vmem, size = 0x20000, scoped, tag = 'input window, operand 3']
    loop: start=0, step=1, limit=34
    $region2: #{mixtral_sparse_moe_block.3} parent=1 // loop_pre_header
      _
    $region3: #{mixtral_sparse_moe_block.3} parent=1 // loop_header
      %s18 = sphi 0, %s22
      %p19 = scmp.ge.s32.totalorder %s18, 34
      %s25 = sphi 0, %s37
      %s26 = sphi 0, %s33
      %s27 = sphi 0, %s25
      %s28 = sphi 0, %s26
      %s29 = sphi 0, %s27
      %s30 = sphi 0, %s28
      %s40 = sphi 0, %s42
      %s43 = sphi 0, %s40
      %s44 = sphi 0, %s43
      %s60 = sphi 0, %s44
      %s70 = sphi 0, %s72
      %s73 = sphi 0, %s70
      %s74 = sphi 0, %s73
      %s90 = sphi 0, %s74
      %s100 = sphi 0, %s102
      %s103 = sphi 0, %s100
      %s104 = sphi 0, %s103
      %s120 = sphi 0, %s104
      %s130 = sphi 0, %s132
      %s133 = sphi 0, %s130
      %s134 = sphi 0, %s133
      %s150 = sphi 0, %s134
      %s156 = sphi 0, %s158
      %s159 = sphi 0, %s156
      %s160 = sphi 0, %s159
      %s176 = sphi 0, %s160
      %s182 = sphi 0, %s184
      %s185 = sphi 0, %s182
      %s186 = sphi 0, %s185
      %s202 = sphi 0, %s186
    $region4: #{mixtral_sparse_moe_block.3} parent=1 // loop_header_branch
      %21 = sbr.rel (%p19) target = $region8
    $region5: #{mixtral_sparse_moe_block.3} parent=1 // loop_body
      %s23 = ssub.s32 %s18, 1
      %s24 = ssub.s32 %s18, 2
      %s31 = sadd.s32 1, %s26
      %p32 = scmp.ge.s32.totalorder %s31, 2
      %s33 = scalar_select %p32, 0, %s31
      %s34 = sadd.s32 1, %s25
      %s35 = scalar_select %p32, %s34, %s25
      %p36 = scmp.ge.s32.totalorder %s35, 16
      %s37 = scalar_select %p36, 0, %s35
      %s38 = ssub.s32 %s25, %s37
      %p39 = scmp.eq.s32.totalorder %s38, 0
      %s41 = sadd.s32 %s40, 1
      %s42 = scalar_select %p39, %s40, %s41
      %p45 = pneg %p39
      %p46 = scmp.eq.s32.totalorder %s18, 31
      %p47 = por %p45, %p46
      %p48 = scmp.ne.s32.totalorder %s40, %s43
      %p49 = scmp.eq.s32.totalorder %s18, 0
      %p50 = por %p48, %p49
      %p51 = scmp.ne.s32.totalorder %s40, %s43
      %p52 = scmp.eq.s32.totalorder %s23, 31
      %p53 = por %p51, %p52
      %p54 = scmp.ne.s32.totalorder %s43, %s44
      %p55 = scmp.eq.s32.totalorder %s23, 0
      %p56 = por %p54, %p55
      %p57 = scmp.ne.s32.totalorder %s43, %s44
      %p58 = scmp.eq.s32.totalorder %s24, 31
      %p59 = por %p57, %p58
      %p61 = scmp.ne.s32.totalorder %s44, %s60
      %p62 = scmp.eq.s32.totalorder %s24, 0
      %p63 = por %p61, %p62
      %s64 = sld [smem:[#allocation4 + %s25]]
      %s65 = sld [smem:[#allocation4 + %s37]]
      %s66 = ssub.s32 %s64, %s65
      %s67 = ssub.s32 %s26, %s33
      %s68 = sor.u32 %s66, %s67
      %p69 = scmp.eq.s32.totalorder %s68, 0
      %s71 = sadd.s32 %s70, 1
      %s72 = scalar_select %p69, %s70, %s71
      %p75 = pneg %p69
      %p76 = scmp.eq.s32.totalorder %s18, 31
      %p77 = por %p75, %p76
      %p78 = scmp.ne.s32.totalorder %s70, %s73
      %p79 = scmp.eq.s32.totalorder %s18, 0
      %p80 = por %p78, %p79
      %p81 = scmp.ne.s32.totalorder %s70, %s73
      %p82 = scmp.eq.s32.totalorder %s23, 31
      %p83 = por %p81, %p82
      %p84 = scmp.ne.s32.totalorder %s73, %s74
      %p85 = scmp.eq.s32.totalorder %s23, 0
      %p86 = por %p84, %p85
      %p87 = scmp.ne.s32.totalorder %s73, %s74
      %p88 = scmp.eq.s32.totalorder %s24, 31
      %p89 = por %p87, %p88
      %p91 = scmp.ne.s32.totalorder %s74, %s90
      %p92 = scmp.eq.s32.totalorder %s24, 0
      %p93 = por %p91, %p92
      %s94 = sld [smem:[#allocation4 + %s25]]
      %s95 = sld [smem:[#allocation4 + %s37]]
      %s96 = ssub.s32 %s94, %s95
      %s97 = ssub.s32 %s26, %s33
      %s98 = sor.u32 %s96, %s97
      %p99 = scmp.eq.s32.totalorder %s98, 0
      %s101 = sadd.s32 %s100, 1
      %s102 = scalar_select %p99, %s100, %s101
      %p105 = pneg %p99
      %p106 = scmp.eq.s32.totalorder %s18, 31
      %p107 = por %p105, %p106
      %p108 = scmp.ne.s32.totalorder %s100, %s103
      %p109 = scmp.eq.s32.totalorder %s18, 0
      %p110 = por %p108, %p109
      %p111 = scmp.ne.s32.totalorder %s100, %s103
      %p112 = scmp.eq.s32.totalorder %s23, 31
      %p113 = por %p111, %p112
      %p114 = scmp.ne.s32.totalorder %s103, %s104
      %p115 = scmp.eq.s32.totalorder %s23, 0
      %p116 = por %p114, %p115
      %p117 = scmp.ne.s32.totalorder %s103, %s104
      %p118 = scmp.eq.s32.totalorder %s24, 31
      %p119 = por %p117, %p118
      %p121 = scmp.ne.s32.totalorder %s104, %s120
      %p122 = scmp.eq.s32.totalorder %s24, 0
      %p123 = por %p121, %p122
      %s124 = sld [smem:[#allocation4 + %s25]]
      %s125 = sld [smem:[#allocation4 + %s37]]
      %s126 = ssub.s32 %s124, %s125
      %s127 = ssub.s32 %s26, %s33
      %s128 = sor.u32 %s126, %s127
      %p129 = scmp.eq.s32.totalorder %s128, 0
      %s131 = sadd.s32 %s130, 1
      %s132 = scalar_select %p129, %s130, %s131
      %p135 = pneg %p129
      %p136 = scmp.eq.s32.totalorder %s18, 31
      %p137 = por %p135, %p136
      %p138 = scmp.ne.s32.totalorder %s130, %s133
      %p139 = scmp.eq.s32.totalorder %s18, 0
      %p140 = por %p138, %p139
      %p141 = scmp.ne.s32.totalorder %s130, %s133
      %p142 = scmp.eq.s32.totalorder %s23, 31
      %p143 = por %p141, %p142
      %p144 = scmp.ne.s32.totalorder %s133, %s134
      %p145 = scmp.eq.s32.totalorder %s23, 0
      %p146 = por %p144, %p145
      %p147 = scmp.ne.s32.totalorder %s133, %s134
      %p148 = scmp.eq.s32.totalorder %s24, 31
      %p149 = por %p147, %p148
      %p151 = scmp.ne.s32.totalorder %s134, %s150
      %p152 = scmp.eq.s32.totalorder %s24, 0
      %p153 = por %p151, %p152
      %s154 = ssub.s32 %s25, %s37
      %p155 = scmp.eq.s32.totalorder %s154, 0
      %s157 = sadd.s32 %s156, 1
      %s158 = scalar_select %p155, %s156, %s157
      %p161 = pneg %p155
      %p162 = scmp.eq.s32.totalorder %s18, 31
      %p163 = por %p161, %p162
      %p164 = scmp.ne.s32.totalorder %s156, %s159
      %p165 = scmp.eq.s32.totalorder %s18, 0
      %p166 = por %p164, %p165
      %p167 = scmp.ne.s32.totalorder %s156, %s159
      %p168 = scmp.eq.s32.totalorder %s23, 31
      %p169 = por %p167, %p168
      %p170 = scmp.ne.s32.totalorder %s159, %s160
      %p171 = scmp.eq.s32.totalorder %s23, 0
      %p172 = por %p170, %p171
      %p173 = scmp.ne.s32.totalorder %s159, %s160
      %p174 = scmp.eq.s32.totalorder %s24, 31
      %p175 = por %p173, %p174
      %p177 = scmp.ne.s32.totalorder %s160, %s176
      %p178 = scmp.eq.s32.totalorder %s24, 0
      %p179 = por %p177, %p178
      %s180 = ssub.s32 %s25, %s37
      %p181 = scmp.eq.s32.totalorder %s180, 0
      %s183 = sadd.s32 %s182, 1
      %s184 = scalar_select %p181, %s182, %s183
      %p187 = pneg %p181
      %p188 = scmp.eq.s32.totalorder %s18, 31
      %p189 = por %p187, %p188
      %p190 = scmp.ne.s32.totalorder %s182, %s185
      %p191 = scmp.eq.s32.totalorder %s18, 0
      %p192 = por %p190, %p191
      %p193 = scmp.ne.s32.totalorder %s182, %s185
      %p194 = scmp.eq.s32.totalorder %s23, 31
      %p195 = por %p193, %p194
      %p196 = scmp.ne.s32.totalorder %s185, %s186
      %p197 = scmp.eq.s32.totalorder %s23, 0
      %p198 = por %p196, %p197
      %p199 = scmp.ne.s32.totalorder %s185, %s186
      %p200 = scmp.eq.s32.totalorder %s24, 31
      %p201 = por %p199, %p200
      %p203 = scmp.ne.s32.totalorder %s186, %s202
      %p204 = scmp.eq.s32.totalorder %s24, 0
      %p205 = por %p203, %p204
      %p206 = scmp.le.s32.totalorder 1, %s18
      %p207 = scmp.lt.s32.totalorder %s18, 33
      %p208 = pnand %p206, %p207
      %p209 = pneg %p208
      // Predicated region
      $region9: #{mixtral_sparse_moe_block.3} parent=5 // pred_check
        _
      $region10: #{mixtral_sparse_moe_block.3} parent=5 // pred_check_branch
        %211 = sbr.rel (%p208) target = $region12
      $region11: #{mixtral_sparse_moe_block.3} parent=5 // pred_region
        %s212 = ssub.s32 %s18, 1
      $region12: #{mixtral_sparse_moe_block.3} parent=5 // pred_fallthru
        _
      %p213 = scmp.lt.s32.totalorder %s18, 32
      // Predicated region
      $region13: #{mixtral_sparse_moe_block.3} parent=5 // pred_check
        %p214 = pneg %p213
      $region14: #{mixtral_sparse_moe_block.3} parent=5 // pred_check_branch
        %216 = sbr.rel (%p214) target = $region16
      $region15: #{mixtral_sparse_moe_block.3} parent=5 // pred_region
        // Predicated region
        $region17: #{mixtral_sparse_moe_block.3} parent=15 // pred_check
          %p217 = pneg %p50
        $region18: #{mixtral_sparse_moe_block.3} parent=15 // pred_check_branch
          %219 = sbr.rel (%p217) target = $region20
        $region19: #{mixtral_sparse_moe_block.3} parent=15 // pred_region
          %s220 = smul.u32 4, %s25
          %p221 = scmp.lt.s32.totalorder %s220, 63
          %s222 = scalar_select %p221, %s220, 63
          %s223 = smul.addr %s222, 8
          %s224 = scalar_lea.vmem %s1, %s223
          %s225 = smul.u32 4, %s25
        $region20: #{mixtral_sparse_moe_block.3} parent=15 // pred_fallthru
          _
        // Predicated region
        $region21: #{mixtral_sparse_moe_block.3} parent=15 // pred_check
          %p226 = pneg %p80
        $region22: #{mixtral_sparse_moe_block.3} parent=15 // pred_check_branch
          %228 = sbr.rel (%p226) target = $region24
        $region23: #{mixtral_sparse_moe_block.3} parent=15 // pred_region
          %s229 = sand.u32 %s70, 1
          %s230 = sand.u32 %s70, 1
          %s231 = smul.addr %s230, 128
          %s232 = scalar_lea.vmem [#allocation5], %s231
          %s233 = sld [smem:[#allocation4 + %s25]]
          %s234 = smul.addr %s233, 32
          %s235 = sadd.s32 %s26, %s234
          %s236 = smul.addr %s235, 8
          %s237 = scalar_lea.vmem %s2, %s236
          // Predicated region
          $region25: #{mixtral_sparse_moe_block.3} parent=23 // pred_check
            _
          $region26: #{mixtral_sparse_moe_block.3} parent=23 // pred_check_branch
            %239 = sbr.rel (0) target = $region28
          $region27: #{mixtral_sparse_moe_block.3} parent=23 // pred_region
            // Predicated region
            $region29: #{mixtral_sparse_moe_block.3} parent=27 // pred_check
              _
            $region30: #{mixtral_sparse_moe_block.3} parent=27 // pred_check_branch
              %241 = sbr.rel (0) target = $region32
            $region31: #{mixtral_sparse_moe_block.3} parent=27 // pred_region
              // Predicated region
              $region44: #{mixtral_sparse_moe_block.3} parent=31 // pred_check
                _
              $region45: #{mixtral_sparse_moe_block.3} parent=31 // pred_check_branch
                %286 = sbr.rel (0) target = $region47
              $region46: #{mixtral_sparse_moe_block.3} parent=31 // pred_region
                loop: start=0, step=1, limit=1
                $region48: #{mixtral_sparse_moe_block.3} parent=46 // loop_pre_header
                  _
                $region49: #{mixtral_sparse_moe_block.3} parent=46 // loop_header
                  %s288 = sphi 0, %s292
                  %p289 = scmp.ge.s32.totalorder %s288, 1
                  %s293 = sphi %s237, %s237
                  %s294 = sphi %s232, %s232
                $region50: #{mixtral_sparse_moe_block.3} parent=46 // loop_header_branch
                  %291 = sbr.rel (%p289) target = $region54
                $region51: #{mixtral_sparse_moe_block.3} parent=46 // loop_body
                  %v295 = vld [vmem:[%s293] sm:$0xff]
                  %296 = vst [vmem:[%s294] sm:$0xff] %v295
                  %v297 = vld [vmem:[%s293 + $0x10] sm:$0xff]
                  %298 = vst [vmem:[%s294 + $0x8] sm:$0xff] %v297
                  %v299 = vld [vmem:[%s293 + $0x20] sm:$0xff]
                  %300 = vst [vmem:[%s294 + $0x10] sm:$0xff] %v299
                  %v301 = vld [vmem:[%s293 + $0x30] sm:$0xff]
                  %302 = vst [vmem:[%s294 + $0x18] sm:$0xff] %v301
                  %v303 = vld [vmem:[%s293 + $0x40] sm:$0xff]
                  %304 = vst [vmem:[%s294 + $0x20] sm:$0xff] %v303
                  %v305 = vld [vmem:[%s293 + $0x50] sm:$0xff]
                  %306 = vst [vmem:[%s294 + $0x28] sm:$0xff] %v305
                  %v307 = vld [vmem:[%s293 + $0x60] sm:$0xff]
                  %308 = vst [vmem:[%s294 + $0x30] sm:$0xff] %v307
                  %v309 = vld [vmem:[%s293 + $0x70] sm:$0xff]
                  %310 = vst [vmem:[%s294 + $0x38] sm:$0xff] %v309
                  %v311 = vld [vmem:[%s293 + $0x80] sm:$0xff]
                  %312 = vst [vmem:[%s294 + $0x40] sm:$0xff] %v311
                  %v313 = vld [vmem:[%s293 + $0x90] sm:$0xff]
                  %314 = vst [vmem:[%s294 + $0x48] sm:$0xff] %v313
                  %v315 = vld [vmem:[%s293 + $0xa0] sm:$0xff]
                  %316 = vst [vmem:[%s294 + $0x50] sm:$0xff] %v315
                  %v317 = vld [vmem:[%s293 + $0xb0] sm:$0xff]
                  %318 = vst [vmem:[%s294 + $0x58] sm:$0xff] %v317
                  %v319 = vld [vmem:[%s293 + $0xc0] sm:$0xff]
                  %320 = vst [vmem:[%s294 + $0x60] sm:$0xff] %v319
                  %v321 = vld [vmem:[%s293 + $0xd0] sm:$0xff]
                  %322 = vst [vmem:[%s294 + $0x68] sm:$0xff] %v321
                  %v323 = vld [vmem:[%s293 + $0xe0] sm:$0xff]
                  %324 = vst [vmem:[%s294 + $0x70] sm:$0xff] %v323
                  %v325 = vld [vmem:[%s293 + $0xf0] sm:$0xff]
                  %326 = vst [vmem:[%s294 + $0x78] sm:$0xff] %v325
                $region52: #{mixtral_sparse_moe_block.3} parent=46 // loop_footer
                  %s292 = sadd.s32 1, %s288
                $region53: #{mixtral_sparse_moe_block.3} parent=46 // loop_footer_branch
                  %287 = sbr.rel target = $region49
                $region54: #{mixtral_sparse_moe_block.3} parent=46 // loop_exit
                  _
              $region47: #{mixtral_sparse_moe_block.3} parent=31 // pred_fallthru
                _
              // Predicated region
              $region55: #{mixtral_sparse_moe_block.3} parent=31 // pred_check
                _
              $region56: #{mixtral_sparse_moe_block.3} parent=31 // pred_check_branch
                %328 = sbr.rel target = $region58
              $region57: #{mixtral_sparse_moe_block.3} parent=31 // pred_region
                _
              $region58: #{mixtral_sparse_moe_block.3} parent=31 // pred_fallthru
                _
            $region32: #{mixtral_sparse_moe_block.3} parent=27 // pred_fallthru
              _
            // Predicated region
            $region33: #{mixtral_sparse_moe_block.3} parent=27 // pred_check
              _
            $region34: #{mixtral_sparse_moe_block.3} parent=27 // pred_check_branch
              %243 = sbr.rel target = $region36
            $region35: #{mixtral_sparse_moe_block.3} parent=27 // pred_region
              loop: start=0, step=1, limit=1
              $region37: #{mixtral_sparse_moe_block.3} parent=35 // loop_pre_header
                _
              $region38: #{mixtral_sparse_moe_block.3} parent=35 // loop_header
                %s246 = sphi 0, %s250
                %p247 = scmp.ge.s32.totalorder %s246, 1
                %s251 = sphi %s237, %s237
                %s252 = sphi %s232, %s232
              $region39: #{mixtral_sparse_moe_block.3} parent=35 // loop_header_branch
                %249 = sbr.rel (%p247) target = $region43
              $region40: #{mixtral_sparse_moe_block.3} parent=35 // loop_body
                %v253 = vld [vmem:[%s251] sm:$0xff]
                %254 = vst [vmem:[%s252] sm:$0xff] %v253
                %v255 = vld [vmem:[%s251 + $0x10] sm:$0xff]
                %256 = vst [vmem:[%s252 + $0x8] sm:$0xff] %v255
                %v257 = vld [vmem:[%s251 + $0x20] sm:$0xff]
                %258 = vst [vmem:[%s252 + $0x10] sm:$0xff] %v257
                %v259 = vld [vmem:[%s251 + $0x30] sm:$0xff]
                %260 = vst [vmem:[%s252 + $0x18] sm:$0xff] %v259
                %v261 = vld [vmem:[%s251 + $0x40] sm:$0xff]
                %262 = vst [vmem:[%s252 + $0x20] sm:$0xff] %v261
                %v263 = vld [vmem:[%s251 + $0x50] sm:$0xff]
                %264 = vst [vmem:[%s252 + $0x28] sm:$0xff] %v263
                %v265 = vld [vmem:[%s251 + $0x60] sm:$0xff]
                %266 = vst [vmem:[%s252 + $0x30] sm:$0xff] %v265
                %v267 = vld [vmem:[%s251 + $0x70] sm:$0xff]
                %268 = vst [vmem:[%s252 + $0x38] sm:$0xff] %v267
                %v269 = vld [vmem:[%s251 + $0x80] sm:$0xff]
                %270 = vst [vmem:[%s252 + $0x40] sm:$0xff] %v269
                %v271 = vld [vmem:[%s251 + $0x90] sm:$0xff]
                %272 = vst [vmem:[%s252 + $0x48] sm:$0xff] %v271
                %v273 = vld [vmem:[%s251 + $0xa0] sm:$0xff]
                %274 = vst [vmem:[%s252 + $0x50] sm:$0xff] %v273
                %v275 = vld [vmem:[%s251 + $0xb0] sm:$0xff]
                %276 = vst [vmem:[%s252 + $0x58] sm:$0xff] %v275
                %v277 = vld [vmem:[%s251 + $0xc0] sm:$0xff]
                %278 = vst [vmem:[%s252 + $0x60] sm:$0xff] %v277
                %v279 = vld [vmem:[%s251 + $0xd0] sm:$0xff]
                %280 = vst [vmem:[%s252 + $0x68] sm:$0xff] %v279
                %v281 = vld [vmem:[%s251 + $0xe0] sm:$0xff]
                %282 = vst [vmem:[%s252 + $0x70] sm:$0xff] %v281
                %v283 = vld [vmem:[%s251 + $0xf0] sm:$0xff]
                %284 = vst [vmem:[%s252 + $0x78] sm:$0xff] %v283
              $region41: #{mixtral_sparse_moe_block.3} parent=35 // loop_footer
                %s250 = sadd.s32 1, %s246
              $region42: #{mixtral_sparse_moe_block.3} parent=35 // loop_footer_branch
                %245 = sbr.rel target = $region38
              $region43: #{mixtral_sparse_moe_block.3} parent=35 // loop_exit
                _
            $region36: #{mixtral_sparse_moe_block.3} parent=27 // pred_fallthru
              _
          $region28: #{mixtral_sparse_moe_block.3} parent=23 // pred_fallthru
            _
          %329 = vnop
        $region24: #{mixtral_sparse_moe_block.3} parent=15 // pred_fallthru
          _
        // Predicated region
        $region59: #{mixtral_sparse_moe_block.3} parent=15 // pred_check
          %p330 = pneg %p110
        $region60: #{mixtral_sparse_moe_block.3} parent=15 // pred_check_branch
          %332 = sbr.rel (%p330) target = $region62
        $region61: #{mixtral_sparse_moe_block.3} parent=15 // pred_region
          %s333 = sand.u32 %s100, 1
          %s334 = sand.u32 %s100, 1
          %s335 = smul.addr %s334, 128
          %s336 = scalar_lea.vmem [#allocation6], %s335
          %s337 = sld [smem:[#allocation4 + %s25]]
          %s338 = smul.addr %s337, 32
          %s339 = sadd.s32 %s26, %s338
          %s340 = smul.addr %s339, 8
          %s341 = scalar_lea.vmem %s3, %s340
          // Predicated region
          $region63: #{mixtral_sparse_moe_block.3} parent=61 // pred_check
            _
          $region64: #{mixtral_sparse_moe_block.3} parent=61 // pred_check_branch
            %343 = sbr.rel (0) target = $region66
          $region65: #{mixtral_sparse_moe_block.3} parent=61 // pred_region
            // Predicated region
            $region67: #{mixtral_sparse_moe_block.3} parent=65 // pred_check
              _
            $region68: #{mixtral_sparse_moe_block.3} parent=65 // pred_check_branch
              %345 = sbr.rel (0) target = $region70
            $region69: #{mixtral_sparse_moe_block.3} parent=65 // pred_region
              // Predicated region
              $region82: #{mixtral_sparse_moe_block.3} parent=69 // pred_check
                _
              $region83: #{mixtral_sparse_moe_block.3} parent=69 // pred_check_branch
                %390 = sbr.rel (0) target = $region85
              $region84: #{mixtral_sparse_moe_block.3} parent=69 // pred_region
                loop: start=0, step=1, limit=1
                $region86: #{mixtral_sparse_moe_block.3} parent=84 // loop_pre_header
                  _
                $region87: #{mixtral_sparse_moe_block.3} parent=84 // loop_header
                  %s392 = sphi 0, %s396
                  %p393 = scmp.ge.s32.totalorder %s392, 1
                  %s397 = sphi %s341, %s341
                  %s398 = sphi %s336, %s336
                $region88: #{mixtral_sparse_moe_block.3} parent=84 // loop_header_branch
                  %395 = sbr.rel (%p393) target = $region92
                $region89: #{mixtral_sparse_moe_block.3} parent=84 // loop_body
                  %v399 = vld [vmem:[%s397] sm:$0xff]
                  %400 = vst [vmem:[%s398] sm:$0xff] %v399
                  %v401 = vld [vmem:[%s397 + $0x10] sm:$0xff]
                  %402 = vst [vmem:[%s398 + $0x8] sm:$0xff] %v401
                  %v403 = vld [vmem:[%s397 + $0x20] sm:$0xff]
                  %404 = vst [vmem:[%s398 + $0x10] sm:$0xff] %v403
                  %v405 = vld [vmem:[%s397 + $0x30] sm:$0xff]
                  %406 = vst [vmem:[%s398 + $0x18] sm:$0xff] %v405
                  %v407 = vld [vmem:[%s397 + $0x40] sm:$0xff]
                  %408 = vst [vmem:[%s398 + $0x20] sm:$0xff] %v407
                  %v409 = vld [vmem:[%s397 + $0x50] sm:$0xff]
                  %410 = vst [vmem:[%s398 + $0x28] sm:$0xff] %v409
                  %v411 = vld [vmem:[%s397 + $0x60] sm:$0xff]
                  %412 = vst [vmem:[%s398 + $0x30] sm:$0xff] %v411
                  %v413 = vld [vmem:[%s397 + $0x70] sm:$0xff]
                  %414 = vst [vmem:[%s398 + $0x38] sm:$0xff] %v413
                  %v415 = vld [vmem:[%s397 + $0x80] sm:$0xff]
                  %416 = vst [vmem:[%s398 + $0x40] sm:$0xff] %v415
                  %v417 = vld [vmem:[%s397 + $0x90] sm:$0xff]
                  %418 = vst [vmem:[%s398 + $0x48] sm:$0xff] %v417
                  %v419 = vld [vmem:[%s397 + $0xa0] sm:$0xff]
                  %420 = vst [vmem:[%s398 + $0x50] sm:$0xff] %v419
                  %v421 = vld [vmem:[%s397 + $0xb0] sm:$0xff]
                  %422 = vst [vmem:[%s398 + $0x58] sm:$0xff] %v421
                  %v423 = vld [vmem:[%s397 + $0xc0] sm:$0xff]
                  %424 = vst [vmem:[%s398 + $0x60] sm:$0xff] %v423
                  %v425 = vld [vmem:[%s397 + $0xd0] sm:$0xff]
                  %426 = vst [vmem:[%s398 + $0x68] sm:$0xff] %v425
                  %v427 = vld [vmem:[%s397 + $0xe0] sm:$0xff]
                  %428 = vst [vmem:[%s398 + $0x70] sm:$0xff] %v427
                  %v429 = vld [vmem:[%s397 + $0xf0] sm:$0xff]
                  %430 = vst [vmem:[%s398 + $0x78] sm:$0xff] %v429
                $region90: #{mixtral_sparse_moe_block.3} parent=84 // loop_footer
                  %s396 = sadd.s32 1, %s392
                $region91: #{mixtral_sparse_moe_block.3} parent=84 // loop_footer_branch
                  %391 = sbr.rel target = $region87
                $region92: #{mixtral_sparse_moe_block.3} parent=84 // loop_exit
                  _
              $region85: #{mixtral_sparse_moe_block.3} parent=69 // pred_fallthru
                _
              // Predicated region
              $region93: #{mixtral_sparse_moe_block.3} parent=69 // pred_check
                _
              $region94: #{mixtral_sparse_moe_block.3} parent=69 // pred_check_branch
                %432 = sbr.rel target = $region96
              $region95: #{mixtral_sparse_moe_block.3} parent=69 // pred_region
                _
              $region96: #{mixtral_sparse_moe_block.3} parent=69 // pred_fallthru
                _
            $region70: #{mixtral_sparse_moe_block.3} parent=65 // pred_fallthru
              _
            // Predicated region
            $region71: #{mixtral_sparse_moe_block.3} parent=65 // pred_check
              _
            $region72: #{mixtral_sparse_moe_block.3} parent=65 // pred_check_branch
              %347 = sbr.rel target = $region74
            $region73: #{mixtral_sparse_moe_block.3} parent=65 // pred_region
              loop: start=0, step=1, limit=1
              $region75: #{mixtral_sparse_moe_block.3} parent=73 // loop_pre_header
                _
              $region76: #{mixtral_sparse_moe_block.3} parent=73 // loop_header
                %s350 = sphi 0, %s354
                %p351 = scmp.ge.s32.totalorder %s350, 1
                %s355 = sphi %s341, %s341
                %s356 = sphi %s336, %s336
              $region77: #{mixtral_sparse_moe_block.3} parent=73 // loop_header_branch
                %353 = sbr.rel (%p351) target = $region81
              $region78: #{mixtral_sparse_moe_block.3} parent=73 // loop_body
                %v357 = vld [vmem:[%s355] sm:$0xff]
                %358 = vst [vmem:[%s356] sm:$0xff] %v357
                %v359 = vld [vmem:[%s355 + $0x10] sm:$0xff]
                %360 = vst [vmem:[%s356 + $0x8] sm:$0xff] %v359
                %v361 = vld [vmem:[%s355 + $0x20] sm:$0xff]
                %362 = vst [vmem:[%s356 + $0x10] sm:$0xff] %v361
                %v363 = vld [vmem:[%s355 + $0x30] sm:$0xff]
                %364 = vst [vmem:[%s356 + $0x18] sm:$0xff] %v363
                %v365 = vld [vmem:[%s355 + $0x40] sm:$0xff]
                %366 = vst [vmem:[%s356 + $0x20] sm:$0xff] %v365
                %v367 = vld [vmem:[%s355 + $0x50] sm:$0xff]
                %368 = vst [vmem:[%s356 + $0x28] sm:$0xff] %v367
                %v369 = vld [vmem:[%s355 + $0x60] sm:$0xff]
                %370 = vst [vmem:[%s356 + $0x30] sm:$0xff] %v369
                %v371 = vld [vmem:[%s355 + $0x70] sm:$0xff]
                %372 = vst [vmem:[%s356 + $0x38] sm:$0xff] %v371
                %v373 = vld [vmem:[%s355 + $0x80] sm:$0xff]
                %374 = vst [vmem:[%s356 + $0x40] sm:$0xff] %v373
                %v375 = vld [vmem:[%s355 + $0x90] sm:$0xff]
                %376 = vst [vmem:[%s356 + $0x48] sm:$0xff] %v375
                %v377 = vld [vmem:[%s355 + $0xa0] sm:$0xff]
                %378 = vst [vmem:[%s356 + $0x50] sm:$0xff] %v377
                %v379 = vld [vmem:[%s355 + $0xb0] sm:$0xff]
                %380 = vst [vmem:[%s356 + $0x58] sm:$0xff] %v379
                %v381 = vld [vmem:[%s355 + $0xc0] sm:$0xff]
                %382 = vst [vmem:[%s356 + $0x60] sm:$0xff] %v381
                %v383 = vld [vmem:[%s355 + $0xd0] sm:$0xff]
                %384 = vst [vmem:[%s356 + $0x68] sm:$0xff] %v383
                %v385 = vld [vmem:[%s355 + $0xe0] sm:$0xff]
                %386 = vst [vmem:[%s356 + $0x70] sm:$0xff] %v385
                %v387 = vld [vmem:[%s355 + $0xf0] sm:$0xff]
                %388 = vst [vmem:[%s356 + $0x78] sm:$0xff] %v387
              $region79: #{mixtral_sparse_moe_block.3} parent=73 // loop_footer
                %s354 = sadd.s32 1, %s350
              $region80: #{mixtral_sparse_moe_block.3} parent=73 // loop_footer_branch
                %349 = sbr.rel target = $region76
              $region81: #{mixtral_sparse_moe_block.3} parent=73 // loop_exit
                _
            $region74: #{mixtral_sparse_moe_block.3} parent=65 // pred_fallthru
              _
          $region66: #{mixtral_sparse_moe_block.3} parent=61 // pred_fallthru
            _
          %433 = vnop
        $region62: #{mixtral_sparse_moe_block.3} parent=15 // pred_fallthru
          _
        // Predicated region
        $region97: #{mixtral_sparse_moe_block.3} parent=15 // pred_check
          %p434 = pneg %p140
        $region98: #{mixtral_sparse_moe_block.3} parent=15 // pred_check_branch
          %436 = sbr.rel (%p434) target = $region100
        $region99: #{mixtral_sparse_moe_block.3} parent=15 // pred_region
          %s437 = sld [smem:[#allocation4 + %s25]]
          %s438 = smul.u32 16, %s26
          %p439 = scmp.lt.s32.totalorder %s437, 7
          %s440 = scalar_select %p439, %s437, 7
          %p441 = scmp.lt.s32.totalorder %s438, 31
          %s442 = scalar_select %p441, %s438, 31
          %s443 = smul.addr %s440, 32
          %s444 = sadd.s32 %s442, %s443
          %s445 = smul.addr %s444, 8
          %s446 = scalar_lea.vmem %s4, %s445
          %s447 = sld [smem:[#allocation4 + %s25]]
          %s448 = smul.u32 16, %s26
        $region100: #{mixtral_sparse_moe_block.3} parent=15 // pred_fallthru
          _
        // Predicated region
        $region101: #{mixtral_sparse_moe_block.3} parent=15 // pred_check
          %p449 = pneg %p166
        $region102: #{mixtral_sparse_moe_block.3} parent=15 // pred_check_branch
          %451 = sbr.rel (%p449) target = $region104
        $region103: #{mixtral_sparse_moe_block.3} parent=15 // pred_region
          %s452 = smul.u32 4, %s25
          %p453 = scmp.lt.s32.totalorder %s452, 63
          %s454 = scalar_select %p453, %s452, 63
          %s455 = smul.addr %s454, 8
          %s456 = scalar_lea.vmem %s5, %s455
          %s457 = smul.u32 4, %s25
        $region104: #{mixtral_sparse_moe_block.3} parent=15 // pred_fallthru
          _
      $region16: #{mixtral_sparse_moe_block.3} parent=5 // pred_fallthru
        _
      %p458 = scmp.le.s32.totalorder 1, %s18
      %p459 = scmp.lt.s32.totalorder %s18, 33
      %p460 = pnand %p458, %p459
      %p461 = pneg %p460
      // Predicated region
      $region105: #{mixtral_sparse_moe_block.3} parent=5 // pred_check
        _
      $region106: #{mixtral_sparse_moe_block.3} parent=5 // pred_check_branch
        %463 = sbr.rel (%p460) target = $region108
      $region107: #{mixtral_sparse_moe_block.3} parent=5 // pred_region
        %s464 = ssub.s32 %s18, 1
        %s465 = sand.u32 %s73, 1
        %s466 = sand.u32 %s73, 1
        %s467 = smul.addr %s466, 128
        %s468 = scalar_lea.vmem [#allocation5], %s467
        // Predicated region
        $region109: #{mixtral_sparse_moe_block.3} parent=107 // pred_check
          %p469 = pneg %p86
        $region110: #{mixtral_sparse_moe_block.3} parent=107 // pred_check_branch
          %471 = sbr.rel (%p469) target = $region112
        $region111: #{mixtral_sparse_moe_block.3} parent=107 // pred_region
          _
        $region112: #{mixtral_sparse_moe_block.3} parent=107 // pred_fallthru
          _
        %s472 = sand.u32 %s103, 1
        %s473 = sand.u32 %s103, 1
        %s474 = smul.addr %s473, 128
        %s475 = scalar_lea.vmem [#allocation6], %s474
        // Predicated region
        $region113: #{mixtral_sparse_moe_block.3} parent=107 // pred_check
          %p476 = pneg %p116
        $region114: #{mixtral_sparse_moe_block.3} parent=107 // pred_check_branch
          %478 = sbr.rel (%p476) target = $region116
        $region115: #{mixtral_sparse_moe_block.3} parent=107 // pred_region
          _
        $region116: #{mixtral_sparse_moe_block.3} parent=107 // pred_fallthru
          _
        %s479 = smul.u32 4, %s27
        %p480 = scmp.lt.s32.totalorder %s479, 63
        %s481 = scalar_select %p480, %s479, 63
        %s482 = smul.addr %s481, 8
        %s483 = scalar_lea.vmem %s1, %s482
        %p484 = pneg %p56
        %p485 = pneg %p53
        %s486 = sand.u32 %s73, 1
        %s487 = sand.u32 %s73, 1
        %s488 = smul.addr %s487, 128
        %s489 = scalar_lea.vmem [#allocation5], %s488
        %p490 = pneg %p86
        %p491 = pneg %p83
        %s492 = sand.u32 %s103, 1
        %s493 = sand.u32 %s103, 1
        %s494 = smul.addr %s493, 128
        %s495 = scalar_lea.vmem [#allocation6], %s494
        %p496 = pneg %p116
        %p497 = pneg %p113
        %s498 = sld [smem:[#allocation4 + %s27]]
        %s499 = smul.u32 16, %s28
        %p500 = scmp.lt.s32.totalorder %s498, 7
        %s501 = scalar_select %p500, %s498, 7
        %p502 = scmp.lt.s32.totalorder %s499, 31
        %s503 = scalar_select %p502, %s499, 31
        %s504 = smul.addr %s501, 32
        %s505 = sadd.s32 %s503, %s504
        %s506 = smul.addr %s505, 8
        %s507 = scalar_lea.vmem %s4, %s506
        %p508 = pneg %p146
        %p509 = pneg %p143
        %s510 = smul.u32 4, %s27
        %p511 = scmp.lt.s32.totalorder %s510, 63
        %s512 = scalar_select %p511, %s510, 63
        %s513 = smul.addr %s512, 8
        %s514 = scalar_lea.vmem %s5, %s513
        %p515 = pneg %p172
        %p516 = pneg %p169
        %p517 = pneg %p198
        %p518 = pneg %p195
        %s519 = smul.u32 4, %s27
        %p520 = scmp.lt.s32.totalorder %s519, 63
        %s521 = scalar_select %p520, %s519, 63
        %s522 = smul.addr %s521, 8
        %s523 = scalar_lea.vmem %s6, %s522
        %s524 = smul.u32 4, %s27
        %p525 = scmp.lt.s32.totalorder %s524, 63
        %s526 = scalar_select %p525, %s524, 63
        %s527 = smul.addr %s526, 8
        %s528 = scalar_lea.vmem %s1, %s527
        %s529 = smul.u32 4, %s27
        %s530 = sld [smem:[#allocation4 + %s27]]
        %s531 = sld [smem:[#allocation4 + %s27]]
        %s532 = sld [smem:[#allocation4 + %s27]]
        %s533 = smul.u32 16, %s28
        %p534 = scmp.lt.s32.totalorder %s532, 7
        %s535 = scalar_select %p534, %s532, 7
        %p536 = scmp.lt.s32.totalorder %s533, 31
        %s537 = scalar_select %p536, %s533, 31
        %s538 = smul.addr %s535, 32
        %s539 = sadd.s32 %s537, %s538
        %s540 = smul.addr %s539, 8
        %s541 = scalar_lea.vmem %s4, %s540
        %s542 = sld [smem:[#allocation4 + %s27]]
        %s543 = smul.u32 16, %s28
        %s544 = smul.u32 4, %s27
        %p545 = scmp.lt.s32.totalorder %s544, 63
        %s546 = scalar_select %p545, %s544, 63
        %s547 = smul.addr %s546, 8
        %s548 = scalar_lea.vmem %s5, %s547
        %s549 = smul.u32 4, %s27
        %s550 = smul.u32 4, %s27
        %p551 = scmp.lt.s32.totalorder %s550, 63
        %s552 = scalar_select %p551, %s550, 63
        %s553 = smul.addr %s552, 8
        %s554 = scalar_lea.vmem %s6, %s553
        %s555 = smul.u32 4, %s27
        %v556 = vld [vmem:[%s528] sm:$0xff]
        %v557 = vld [vmem:[%s528 + $0x8] sm:$0xff]
        %v558 = vld [vmem:[%s528 + $0x10] sm:$0xff]
        %v559 = vld [vmem:[%s528 + $0x18] sm:$0xff]
        %v560 = vld [vmem:[%s468] sm:$0xff]
        %v561 = vld [vmem:[%s468 + $0x8] sm:$0xff]
        %v562 = vld [vmem:[%s468 + $0x10] sm:$0xff]
        %v563 = vld [vmem:[%s468 + $0x18] sm:$0xff]
        %v564 = vld [vmem:[%s468 + $0x20] sm:$0xff]
        %v565 = vld [vmem:[%s468 + $0x28] sm:$0xff]
        %v566 = vld [vmem:[%s468 + $0x30] sm:$0xff]
        %v567 = vld [vmem:[%s468 + $0x38] sm:$0xff]
        %v568 = vld [vmem:[%s468 + $0x40] sm:$0xff]
        %v569 = vld [vmem:[%s468 + $0x48] sm:$0xff]
        %v570 = vld [vmem:[%s468 + $0x50] sm:$0xff]
        %v571 = vld [vmem:[%s468 + $0x58] sm:$0xff]
        %v572 = vld [vmem:[%s468 + $0x60] sm:$0xff]
        %v573 = vld [vmem:[%s468 + $0x68] sm:$0xff]
        %v574 = vld [vmem:[%s468 + $0x70] sm:$0xff]
        %v575 = vld [vmem:[%s468 + $0x78] sm:$0xff]
        %576 = vmatprep.subr.mxu0 0.0
        %577 = vmatpush1.msra.mxu0 %v560
        %578 = vmatprep.subr.mxu0 0.0
        %579 = vmatpush1.msra.mxu0 %v561
        %580 = vmatprep.subr.mxu0 0.0
        %581 = vmatpush1.msra.mxu0 %v562
        %582 = vmatprep.subr.mxu0 0.0
        %583 = vmatpush1.msra.mxu0 %v563
        %584 = vmatprep.subr.mxu0 0.0
        %585 = vmatpush1.msra.mxu0 %v564
        %586 = vmatprep.subr.mxu0 0.0
        %587 = vmatpush1.msra.mxu0 %v565
        %588 = vmatprep.subr.mxu0 0.0
        %589 = vmatpush1.msra.mxu0 %v566
        %590 = vmatprep.subr.mxu0 0.0
        %591 = vmatpush1.msra.mxu0 %v567
        %592 = vmatprep.subr.mxu0 0.0
        %593 = vmatpush1.msra.mxu0 %v568
        %594 = vmatprep.subr.mxu0 0.0
        %595 = vmatpush1.msra.mxu0 %v569
        %596 = vmatprep.subr.mxu0 0.0
        %597 = vmatpush1.msra.mxu0 %v570
        %598 = vmatprep.subr.mxu0 0.0
        %599 = vmatpush1.msra.mxu0 %v571
        %600 = vmatprep.subr.mxu0 0.0
        %601 = vmatpush1.msra.mxu0 %v572
        %602 = vmatprep.subr.mxu0 0.0
        %603 = vmatpush1.msra.mxu0 %v573
        %604 = vmatprep.subr.mxu0 0.0
        %605 = vmatpush1.msra.mxu0 %v574
        %606 = vmatprep.subr.mxu0 0.0
        %607 = vmatpush1.msra.mxu0 %v575
        %608 = vmatprep.subr.mxu0 0.0
        %609 = vmatpush1.msra.mxu0 0.0
        %610 = vmatprep.subr.mxu0 0.0
        %611 = vmatpush1.msra.mxu0 0.0
        %612 = vmatprep.subr.mxu0 0.0
        %613 = vmatpush1.msra.mxu0 0.0
        %614 = vmatprep.subr.mxu0 0.0
        %615 = vmatpush1.msra.mxu0 0.0
        %616 = vmatprep.subr.mxu0 0.0
        %617 = vmatpush1.msra.mxu0 0.0
        %618 = vmatprep.subr.mxu0 0.0
        %619 = vmatpush1.msra.mxu0 0.0
        %620 = vmatprep.subr.mxu0 0.0
        %621 = vmatpush1.msra.mxu0 0.0
        %622 = vmatprep.subr.mxu0 0.0
        %623 = vmatpush1.msra.mxu0 0.0
        %624 = vmatprep.subr.mxu0 0.0
        %625 = vmatpush1.msra.mxu0 0.0
        %626 = vmatprep.subr.mxu0 0.0
        %627 = vmatpush1.msra.mxu0 0.0
        %628 = vmatprep.subr.mxu0 0.0
        %629 = vmatpush1.msra.mxu0 0.0
        %630 = vmatprep.subr.mxu0 0.0
        %631 = vmatpush1.msra.mxu0 0.0
        %632 = vmatprep.subr.mxu0 0.0
        %633 = vmatpush1.msra.mxu0 0.0
        %634 = vmatprep.subr.mxu0 0.0
        %635 = vmatpush1.msra.mxu0 0.0
        %636 = vmatprep.subr.mxu0 0.0
        %637 = vmatpush1.msra.mxu0 0.0
        %638 = vmatprep.subr.mxu0 0.0
        %639 = vmatpush1.msra.mxu0 0.0
        %640 = vmatprep.mubr.f32.mxu0 0.0
        %641 = vmatmul.mubr.f32.gmra.mrb[0].mxu0 %v556
        %v642 = vpop.f32.mrb[0].mxu0
        %v643 = vadd.f32 0.0, %v642
        %v644 = vpop.f32.mrb[0].mxu0
        %645 = vmatprep.mubr.f32.mxu0 0.0
        %646 = vmatmul.mubr.f32.gmra.mrb[0].mxu0 %v557
        %v647 = vpop.f32.mrb[0].mxu0
        %v648 = vadd.f32 0.0, %v647
        %v649 = vpop.f32.mrb[0].mxu0
        %650 = vmatprep.mubr.f32.mxu0 0.0
        %651 = vmatmul.mubr.f32.gmra.mrb[0].mxu0 %v558
        %v652 = vpop.f32.mrb[0].mxu0
        %v653 = vadd.f32 0.0, %v652
        %v654 = vpop.f32.mrb[0].mxu0
        %655 = vmatprep.mubr.f32.mxu0 0.0
        %656 = vmatmul.mubr.f32.gmra.mrb[0].mxu0 %v559
        %v657 = vpop.f32.mrb[0].mxu0
        %v658 = vadd.f32 0.0, %v657
        %v659 = vpop.f32.mrb[0].mxu0
        %660 = vdwg.mxu0
        %v661 = vld [vmem:[%s475] sm:$0xff]
        %v662 = vld [vmem:[%s475 + $0x8] sm:$0xff]
        %v663 = vld [vmem:[%s475 + $0x10] sm:$0xff]
        %v664 = vld [vmem:[%s475 + $0x18] sm:$0xff]
        %v665 = vld [vmem:[%s475 + $0x20] sm:$0xff]
        %v666 = vld [vmem:[%s475 + $0x28] sm:$0xff]
        %v667 = vld [vmem:[%s475 + $0x30] sm:$0xff]
        %v668 = vld [vmem:[%s475 + $0x38] sm:$0xff]
        %v669 = vld [vmem:[%s475 + $0x40] sm:$0xff]
        %v670 = vld [vmem:[%s475 + $0x48] sm:$0xff]
        %v671 = vld [vmem:[%s475 + $0x50] sm:$0xff]
        %v672 = vld [vmem:[%s475 + $0x58] sm:$0xff]
        %v673 = vld [vmem:[%s475 + $0x60] sm:$0xff]
        %v674 = vld [vmem:[%s475 + $0x68] sm:$0xff]
        %v675 = vld [vmem:[%s475 + $0x70] sm:$0xff]
        %v676 = vld [vmem:[%s475 + $0x78] sm:$0xff]
        %677 = vmatprep.subr.mxu0 0.0
        %678 = vmatpush1.msra.mxu0 %v661
        %679 = vmatprep.subr.mxu0 0.0
        %680 = vmatpush1.msra.mxu0 %v662
        %681 = vmatprep.subr.mxu0 0.0
        %682 = vmatpush1.msra.mxu0 %v663
        %683 = vmatprep.subr.mxu0 0.0
        %684 = vmatpush1.msra.mxu0 %v664
        %685 = vmatprep.subr.mxu0 0.0
        %686 = vmatpush1.msra.mxu0 %v665
        %687 = vmatprep.subr.mxu0 0.0
        %688 = vmatpush1.msra.mxu0 %v666
        %689 = vmatprep.subr.mxu0 0.0
        %690 = vmatpush1.msra.mxu0 %v667
        %691 = vmatprep.subr.mxu0 0.0
        %692 = vmatpush1.msra.mxu0 %v668
        %693 = vmatprep.subr.mxu0 0.0
        %694 = vmatpush1.msra.mxu0 %v669
        %695 = vmatprep.subr.mxu0 0.0
        %696 = vmatpush1.msra.mxu0 %v670
        %697 = vmatprep.subr.mxu0 0.0
        %698 = vmatpush1.msra.mxu0 %v671
        %699 = vmatprep.subr.mxu0 0.0
        %700 = vmatpush1.msra.mxu0 %v672
        %701 = vmatprep.subr.mxu0 0.0
        %702 = vmatpush1.msra.mxu0 %v673
        %703 = vmatprep.subr.mxu0 0.0
        %704 = vmatpush1.msra.mxu0 %v674
        %705 = vmatprep.subr.mxu0 0.0
        %706 = vmatpush1.msra.mxu0 %v675
        %707 = vmatprep.subr.mxu0 0.0
        %708 = vmatpush1.msra.mxu0 %v676
        %709 = vmatprep.subr.mxu0 0.0
        %710 = vmatpush1.msra.mxu0 0.0
        %711 = vmatprep.subr.mxu0 0.0
        %712 = vmatpush1.msra.mxu0 0.0
        %713 = vmatprep.subr.mxu0 0.0
        %714 = vmatpush1.msra.mxu0 0.0
        %715 = vmatprep.subr.mxu0 0.0
        %716 = vmatpush1.msra.mxu0 0.0
        %717 = vmatprep.subr.mxu0 0.0
        %718 = vmatpush1.msra.mxu0 0.0
        %719 = vmatprep.subr.mxu0 0.0
        %720 = vmatpush1.msra.mxu0 0.0
        %721 = vmatprep.subr.mxu0 0.0
        %722 = vmatpush1.msra.mxu0 0.0
        %723 = vmatprep.subr.mxu0 0.0
        %724 = vmatpush1.msra.mxu0 0.0
        %725 = vmatprep.subr.mxu0 0.0
        %726 = vmatpush1.msra.mxu0 0.0
        %727 = vmatprep.subr.mxu0 0.0
        %728 = vmatpush1.msra.mxu0 0.0
        %729 = vmatprep.subr.mxu0 0.0
        %730 = vmatpush1.msra.mxu0 0.0
        %731 = vmatprep.subr.mxu0 0.0
        %732 = vmatpush1.msra.mxu0 0.0
        %733 = vmatprep.subr.mxu0 0.0
        %734 = vmatpush1.msra.mxu0 0.0
        %735 = vmatprep.subr.mxu0 0.0
        %736 = vmatpush1.msra.mxu0 0.0
        %737 = vmatprep.subr.mxu0 0.0
        %738 = vmatpush1.msra.mxu0 0.0
        %739 = vmatprep.subr.mxu0 0.0
        %740 = vmatpush1.msra.mxu0 0.0
        %741 = vmatprep.mubr.f32.mxu0 0.0
        %742 = vmatmul.mubr.f32.gmra.mrb[0].mxu0 %v556
        %v743 = vpop.f32.mrb[0].mxu0
        %v744 = vadd.f32 0.0, %v743
        %v745 = vpop.f32.mrb[0].mxu0
        %746 = vmatprep.mubr.f32.mxu0 0.0
        %747 = vmatmul.mubr.f32.gmra.mrb[0].mxu0 %v557
        %v748 = vpop.f32.mrb[0].mxu0
        %v749 = vadd.f32 0.0, %v748
        %v750 = vpop.f32.mrb[0].mxu0
        %751 = vmatprep.mubr.f32.mxu0 0.0
        %752 = vmatmul.mubr.f32.gmra.mrb[0].mxu0 %v558
        %v753 = vpop.f32.mrb[0].mxu0
        %v754 = vadd.f32 0.0, %v753
        %v755 = vpop.f32.mrb[0].mxu0
        %756 = vmatprep.mubr.f32.mxu0 0.0
        %757 = vmatmul.mubr.f32.gmra.mrb[0].mxu0 %v559
        %v758 = vpop.f32.mrb[0].mxu0
        %v759 = vadd.f32 0.0, %v758
        %v760 = vpop.f32.mrb[0].mxu0
        %761 = vdwg.mxu0
        %v762 = vxor.u32 %v643, 2147483648
        %v763 = vxor.u32 %v648, 2147483648
        %v764 = vxor.u32 %v653, 2147483648
        %v765 = vxor.u32 %v658, 2147483648
        %v766 = vmul.f32 %v762, 1.442695
        %v767 = vpow.pop %v766
        %v768 = vmul.f32 %v763, 1.442695
        %v769 = vpow.pop %v768
        %v770 = vmul.f32 %v764, 1.442695
        %v771 = vpow.pop %v770
        %v772 = vmul.f32 %v765, 1.442695
        %v773 = vpow.pop %v772
        %v774 = vadd.f32 %v767, 1.0
        %v775 = vadd.f32 %v769, 1.0
        %v776 = vadd.f32 %v771, 1.0
        %v777 = vadd.f32 %v773, 1.0
        %v778 = vrcp.pop %v774
        %v779 = vmul.f32 1.0, %v778
        %v780 = vrcp.pop %v775
        %v781 = vmul.f32 1.0, %v780
        %v782 = vrcp.pop %v776
        %v783 = vmul.f32 1.0, %v782
        %v784 = vrcp.pop %v777
        %v785 = vmul.f32 1.0, %v784
        %v786 = vmul.f32 %v643, %v779
        %v787 = vmul.f32 %v648, %v781
        %v788 = vmul.f32 %v653, %v783
        %v789 = vmul.f32 %v658, %v785
        %v790 = vmul.f32 %v786, %v744
        %v791 = vmul.f32 %v787, %v749
        %v792 = vmul.f32 %v788, %v754
        %v793 = vmul.f32 %v789, %v759
        %v794 = vld [vmem:[%s548] sm:$0xff]
        %v795 = vld [vmem:[%s548 + $0x8] sm:$0xff]
        %v796 = vld [vmem:[%s548 + $0x10] sm:$0xff]
        %v797 = vld [vmem:[%s548 + $0x18] sm:$0xff]
        %799 = vset.pattern.permute.xlu0 0
        %800 = vperm.xlu0 %799, %v794
        %v801 = vpop.permute.xlu0 %800
        %804 = vset.pattern.permute.xlu0 0
        %805 = vperm.xlu0 %804, %v795
        %v806 = vpop.permute.xlu0 %805
        %809 = vset.pattern.permute.xlu0 0
        %810 = vperm.xlu0 %809, %v796
        %v811 = vpop.permute.xlu0 %810
        %814 = vset.pattern.permute.xlu0 0
        %815 = vperm.xlu0 %814, %v797
        %v816 = vpop.permute.xlu0 %815
        %v818 = vmul.f32 %v790, %v801
        %v819 = vmul.f32 %v791, %v806
        %v820 = vmul.f32 %v792, %v811
        %v821 = vmul.f32 %v793, %v816
        %v822 = vld [vmem:[%s541] sm:$0xff]
        %v823 = vld [vmem:[%s541 + $0x8] sm:$0xff]
        %v824 = vld [vmem:[%s541 + $0x10] sm:$0xff]
        %v825 = vld [vmem:[%s541 + $0x18] sm:$0xff]
        %v826 = vld [vmem:[%s541 + $0x20] sm:$0xff]
        %v827 = vld [vmem:[%s541 + $0x28] sm:$0xff]
        %v828 = vld [vmem:[%s541 + $0x30] sm:$0xff]
        %v829 = vld [vmem:[%s541 + $0x38] sm:$0xff]
        %v830 = vld [vmem:[%s541 + $0x40] sm:$0xff]
        %v831 = vld [vmem:[%s541 + $0x48] sm:$0xff]
        %v832 = vld [vmem:[%s541 + $0x50] sm:$0xff]
        %v833 = vld [vmem:[%s541 + $0x58] sm:$0xff]
        %v834 = vld [vmem:[%s541 + $0x60] sm:$0xff]
        %v835 = vld [vmem:[%s541 + $0x68] sm:$0xff]
        %v836 = vld [vmem:[%s541 + $0x70] sm:$0xff]
        %v837 = vld [vmem:[%s541 + $0x78] sm:$0xff]
        %838 = vmatprep.subr.mxu0 0.0
        %839 = vmatpush1.msra.mxu0 %v822
        %840 = vmatprep.subr.mxu0 0.0
        %841 = vmatpush1.msra.mxu0 %v823
        %842 = vmatprep.subr.mxu0 0.0
        %843 = vmatpush1.msra.mxu0 %v824
        %844 = vmatprep.subr.mxu0 0.0
        %845 = vmatpush1.msra.mxu0 %v825
        %846 = vmatprep.subr.mxu0 0.0
        %847 = vmatpush1.msra.mxu0 %v826
        %848 = vmatprep.subr.mxu0 0.0
        %849 = vmatpush1.msra.mxu0 %v827
        %850 = vmatprep.subr.mxu0 0.0
        %851 = vmatpush1.msra.mxu0 %v828
        %852 = vmatprep.subr.mxu0 0.0
        %853 = vmatpush1.msra.mxu0 %v829
        %854 = vmatprep.subr.mxu0 0.0
        %855 = vmatpush1.msra.mxu0 %v830
        %856 = vmatprep.subr.mxu0 0.0
        %857 = vmatpush1.msra.mxu0 %v831
        %858 = vmatprep.subr.mxu0 0.0
        %859 = vmatpush1.msra.mxu0 %v832
        %860 = vmatprep.subr.mxu0 0.0
        %861 = vmatpush1.msra.mxu0 %v833
        %862 = vmatprep.subr.mxu0 0.0
        %863 = vmatpush1.msra.mxu0 %v834
        %864 = vmatprep.subr.mxu0 0.0
        %865 = vmatpush1.msra.mxu0 %v835
        %866 = vmatprep.subr.mxu0 0.0
        %867 = vmatpush1.msra.mxu0 %v836
        %868 = vmatprep.subr.mxu0 0.0
        %869 = vmatpush1.msra.mxu0 %v837
        %870 = vmatprep.subr.mxu0 0.0
        %871 = vmatpush1.msra.mxu0 0.0
        %872 = vmatprep.subr.mxu0 0.0
        %873 = vmatpush1.msra.mxu0 0.0
        %874 = vmatprep.subr.mxu0 0.0
        %875 = vmatpush1.msra.mxu0 0.0
        %876 = vmatprep.subr.mxu0 0.0
        %877 = vmatpush1.msra.mxu0 0.0
        %878 = vmatprep.subr.mxu0 0.0
        %879 = vmatpush1.msra.mxu0 0.0
        %880 = vmatprep.subr.mxu0 0.0
        %881 = vmatpush1.msra.mxu0 0.0
        %882 = vmatprep.subr.mxu0 0.0
        %883 = vmatpush1.msra.mxu0 0.0
        %884 = vmatprep.subr.mxu0 0.0
        %885 = vmatpush1.msra.mxu0 0.0
        %886 = vmatprep.subr.mxu0 0.0
        %887 = vmatpush1.msra.mxu0 0.0
        %888 = vmatprep.subr.mxu0 0.0
        %889 = vmatpush1.msra.mxu0 0.0
        %890 = vmatprep.subr.mxu0 0.0
        %891 = vmatpush1.msra.mxu0 0.0
        %892 = vmatprep.subr.mxu0 0.0
        %893 = vmatpush1.msra.mxu0 0.0
        %894 = vmatprep.subr.mxu0 0.0
        %895 = vmatpush1.msra.mxu0 0.0
        %896 = vmatprep.subr.mxu0 0.0
        %897 = vmatpush1.msra.mxu0 0.0
        %898 = vmatprep.subr.mxu0 0.0
        %899 = vmatpush1.msra.mxu0 0.0
        %900 = vmatprep.subr.mxu0 0.0
        %901 = vmatpush1.msra.mxu0 0.0
        %902 = vmatprep.mubr.f32.mxu0 0.0
        %903 = vmatmul.mubr.f32.gmra.mrb[0].mxu0 %v818
        %v904 = vpop.f32.mrb[0].mxu0
        %v905 = vadd.f32 0.0, %v904
        %v906 = vpop.f32.mrb[0].mxu0
        %907 = vmatprep.mubr.f32.mxu0 0.0
        %908 = vmatmul.mubr.f32.gmra.mrb[0].mxu0 %v819
        %v909 = vpop.f32.mrb[0].mxu0
        %v910 = vadd.f32 0.0, %v909
        %v911 = vpop.f32.mrb[0].mxu0
        %912 = vmatprep.mubr.f32.mxu0 0.0
        %913 = vmatmul.mubr.f32.gmra.mrb[0].mxu0 %v820
        %v914 = vpop.f32.mrb[0].mxu0
        %v915 = vadd.f32 0.0, %v914
        %v916 = vpop.f32.mrb[0].mxu0
        %917 = vmatprep.mubr.f32.mxu0 0.0
        %918 = vmatmul.mubr.f32.gmra.mrb[0].mxu0 %v821
        %v919 = vpop.f32.mrb[0].mxu0
        %v920 = vadd.f32 0.0, %v919
        %v921 = vpop.f32.mrb[0].mxu0
        %922 = vdwg.mxu0
        %p923 = scmp.eq.s32.totalorder %s28, 0
        // Predicated region
        $region117: #{mixtral_sparse_moe_block.3} parent=107 // pred_check
          %p924 = pneg %p923
        $region118: #{mixtral_sparse_moe_block.3} parent=107 // pred_check_branch
          %926 = sbr.rel (%p924) target = $region120
        $region119: #{mixtral_sparse_moe_block.3} parent=107 // pred_region
          %927 = vst [vmem:[#allocation2] sm:$0xff] %v905
          %928 = vst [vmem:[#allocation2 + $0x8] sm:$0xff] %v910
          %929 = vst [vmem:[#allocation2 + $0x10] sm:$0xff] %v915
          %930 = vst [vmem:[#allocation2 + $0x18] sm:$0xff] %v920
        $region120: #{mixtral_sparse_moe_block.3} parent=107 // pred_fallthru
          _
        %p931 = scmp.gt.s32.totalorder %s28, 0
        // Predicated region
        $region121: #{mixtral_sparse_moe_block.3} parent=107 // pred_check
          %p932 = pneg %p931
        $region122: #{mixtral_sparse_moe_block.3} parent=107 // pred_check_branch
          %934 = sbr.rel (%p932) target = $region124
        $region123: #{mixtral_sparse_moe_block.3} parent=107 // pred_region
          %v935 = vld [vmem:[#allocation2] sm:$0xff]
          %v936 = vld [vmem:[#allocation2 + $0x8] sm:$0xff]
          %v937 = vld [vmem:[#allocation2 + $0x10] sm:$0xff]
          %v938 = vld [vmem:[#allocation2 + $0x18] sm:$0xff]
          %v939 = vadd.f32 %v935, %v905
          %v940 = vadd.f32 %v936, %v910
          %v941 = vadd.f32 %v937, %v915
          %v942 = vadd.f32 %v938, %v920
          %943 = vst [vmem:[#allocation2] sm:$0xff] %v939
          %944 = vst [vmem:[#allocation2 + $0x8] sm:$0xff] %v940
          %945 = vst [vmem:[#allocation2 + $0x10] sm:$0xff] %v941
          %946 = vst [vmem:[#allocation2 + $0x18] sm:$0xff] %v942
        $region124: #{mixtral_sparse_moe_block.3} parent=107 // pred_fallthru
          _
        %p947 = scmp.eq.s32.totalorder %s28, 1
        // Predicated region
        $region125: #{mixtral_sparse_moe_block.3} parent=107 // pred_check
          %p948 = pneg %p947
        $region126: #{mixtral_sparse_moe_block.3} parent=107 // pred_check_branch
          %950 = sbr.rel (%p948) target = $region128
        $region127: #{mixtral_sparse_moe_block.3} parent=107 // pred_region
          %v951 = vld [vmem:[#allocation2] sm:$0xff]
          %v952 = vld [vmem:[#allocation2 + $0x8] sm:$0xff]
          %v953 = vld [vmem:[#allocation2 + $0x10] sm:$0xff]
          %v954 = vld [vmem:[#allocation2 + $0x18] sm:$0xff]
          %955 = vst [vmem:[%s554] sm:$0xff] %v951
          %956 = vst [vmem:[%s554 + $0x8] sm:$0xff] %v952
          %957 = vst [vmem:[%s554 + $0x10] sm:$0xff] %v953
          %958 = vst [vmem:[%s554 + $0x18] sm:$0xff] %v954
        $region128: #{mixtral_sparse_moe_block.3} parent=107 // pred_fallthru
          _
        %s959 = smul.u32 4, %s27
        %p960 = scmp.lt.s32.totalorder %s959, 63
        %s961 = scalar_select %p960, %s959, 63
        %s962 = smul.addr %s961, 8
        %s963 = scalar_lea.vmem %s6, %s962
        // Predicated region
        $region129: #{mixtral_sparse_moe_block.3} parent=107 // pred_check
          %p964 = pneg %p195
        $region130: #{mixtral_sparse_moe_block.3} parent=107 // pred_check_branch
          %966 = sbr.rel (%p964) target = $region132
        $region131: #{mixtral_sparse_moe_block.3} parent=107 // pred_region
          %s967 = smul.u32 4, %s27
        $region132: #{mixtral_sparse_moe_block.3} parent=107 // pred_fallthru
          _
      $region108: #{mixtral_sparse_moe_block.3} parent=5 // pred_fallthru
        _
      %p968 = scmp.le.s32.totalorder 2, %s18
      // Predicated region
      $region133: #{mixtral_sparse_moe_block.3} parent=5 // pred_check
        %p969 = pneg %p968
      $region134: #{mixtral_sparse_moe_block.3} parent=5 // pred_check_branch
        %971 = sbr.rel (%p969) target = $region136
      $region135: #{mixtral_sparse_moe_block.3} parent=5 // pred_region
        %s972 = ssub.s32 %s18, 2
        // Predicated region
        $region137: #{mixtral_sparse_moe_block.3} parent=135 // pred_check
          %p973 = pneg %p201
        $region138: #{mixtral_sparse_moe_block.3} parent=135 // pred_check_branch
          %975 = sbr.rel (%p973) target = $region140
        $region139: #{mixtral_sparse_moe_block.3} parent=135 // pred_region
          %s976 = smul.u32 4, %s29
          %p977 = scmp.lt.s32.totalorder %s976, 63
          %s978 = scalar_select %p977, %s976, 63
          %s979 = smul.addr %s978, 8
          %s980 = scalar_lea.vmem %s6, %s979
        $region140: #{mixtral_sparse_moe_block.3} parent=135 // pred_fallthru
          _
      $region136: #{mixtral_sparse_moe_block.3} parent=5 // pred_fallthru
        _
    $region6: #{mixtral_sparse_moe_block.3} parent=1 // loop_footer
      %s22 = sadd.s32 1, %s18
    $region7: #{mixtral_sparse_moe_block.3} parent=1 // loop_footer_branch
      %17 = sbr.rel target = $region3
    $region8: #{mixtral_sparse_moe_block.3} parent=1 // loop_exit
      _

</llo_original>
